<compile_context>
chip_gen: v6e
topology: v6e:2x2x1
jax: 0.10.0
libtpu: 0.0.40
codegen_flags: <defaults>
</compile_context>

<pallas_src>
import jax
import jax.numpy as jnp
from jax import lax
from jax.experimental import pallas as pl
from jax.experimental.pallas import tpu as pltpu

EPS = 1e-5  # PyTorch BatchNorm2d default eps


# ---------------------------------------------------------------------------
# Kernel
# ---------------------------------------------------------------------------
def _make_conv_block_kernel(N, H, W, K, Cin_p, Cout):
    ph = K // 2
    nh = N * H
    w_cin = W * Cin_p
    w_cout = W * Cout
    inv_count = 1.0 / float(N * H * W)   # elements per channel (batch stats)

    def _selectors():
        # e[c, l]  = 1 iff l % Cout == c   (expand (1,Cout) -> (1,W*Cout))
        # et[l, c] = 1 iff l % Cout == c   (fold   (1,W*Cout) -> (1,Cout))
        c_e = lax.broadcasted_iota(jnp.int32, (Cout, w_cout), 0)
        l_e = lax.broadcasted_iota(jnp.int32, (Cout, w_cout), 1)
        e = (l_e % Cout == c_e).astype(jnp.float32)
        l_f = lax.broadcasted_iota(jnp.int32, (w_cout, Cout), 0)
        c_f = lax.broadcasted_iota(jnp.int32, (w_cout, Cout), 1)
        et = (l_f % Cout == c_f).astype(jnp.float32)
        return e, et

    def _conv_taps(src, w_ref, width):
        """sum_kh row_shift(src, kh-ph) @ w_ref[kh*width:(kh+1)*width, :].

        Row shifts along H use pltpu.roll on the sublane axis; rows whose
        source falls outside the image (H zero padding / cross-image
        boundary) are masked to zero.  The kw taps and the W zero padding are
        folded into the block-Toeplitz weight slabs, so the output stays a
        lane-dense (N*H, W*Cout) tile with 128-wide contractions per tap.
        """
        h_idx = lax.broadcasted_iota(jnp.int32, src.shape, 0) % H
        acc = jnp.dot(src.astype(jnp.bfloat16),
                      w_ref[ph * width:(ph + 1) * width, :],
                      preferred_element_type=jnp.float32)
        for kh in range(K):
            dh = kh - ph
            if dh == 0:
                continue
            valid = jnp.logical_and(h_idx + dh >= 0, h_idx + dh < H)
            shifted = pltpu.roll(src, shift=(-dh) % nh, axis=0)
            tap = jnp.where(valid, shifted, 0.0).astype(jnp.bfloat16)
            acc = acc + jnp.dot(tap,
                                w_ref[kh * width:(kh + 1) * width, :],
                                preferred_element_type=jnp.float32)
        return acc

    def _bn_relu(acc, gamma_c, beta_c, e, et):
        """Train-mode BatchNorm + ReLU on a lane-dense (N*H, W*Cout) tile."""
        # One-pass stats (f32 sums over N*H*W elems per channel; fine here).
        # TODO(synk): use a two-pass / Welford update in the tiled large-size
        # version (post-ReLU inputs have |mean| >> std).
        s = jnp.sum(acc, axis=0, keepdims=True)            # (1, W*Cout)
        ss = jnp.sum(acc * acc, axis=0, keepdims=True)     # (1, W*Cout)
        mean_c = jnp.dot(s, et, preferred_element_type=jnp.float32) * inv_count
        ex2_c = jnp.dot(ss, et, preferred_element_type=jnp.float32) * inv_count
        var_c = ex2_c - mean_c * mean_c                    # biased batch var
        scale_c = lax.rsqrt(var_c + EPS) * gamma_c         # (1, Cout)
        shift_c = beta_c - mean_c * scale_c                # (1, Cout)
        scale = jnp.dot(scale_c, e, preferred_element_type=jnp.float32)
        shift = jnp.dot(shift_c, e, preferred_element_type=jnp.float32)
        return jnp.maximum(acc * scale + shift, 0.0)

    def kernel(x_ref, w1_ref, w2_ref, g1_ref, be1_ref, g2_ref, be2_ref,
               out_ref):
        e, et = _selectors()
        # conv1 + BN + ReLU.  Conv bias omitted: a per-channel constant added
        # before train-mode BatchNorm is exactly cancelled by the mean.
        acc1 = _conv_taps(x_ref[...], w1_ref, w_cin)
        h1 = _bn_relu(acc1, g1_ref[...], be1_ref[...], e, et)
        # conv2 + BN + ReLU straight from the on-chip h1 value (no scratch).
        acc2 = _conv_taps(h1, w2_ref, w_cout)
        out_ref[...] = _bn_relu(acc2, g2_ref[...], be2_ref[...], e, et)

    return kernel


# ---------------------------------------------------------------------------
# Wrapper
# ---------------------------------------------------------------------------
def _build_big_weight(w_hwio, W):
    """(K, K, Cin, Cout) conv weight -> (K*W*Cin, W*Cout) per-kh Toeplitz slabs.

    big[kh*W*Cin + w_in*Cin + ci, w_out*Cout + co] = w[kh, w_in-w_out+ph, ci, co]
    (zero outside the kw band -> SAME zero padding along W is folded in).
    """
    K = w_hwio.shape[0]
    Cin, Cout = w_hwio.shape[2], w_hwio.shape[3]
    ph = K // 2
    blocks = []
    for kh in range(K):
        blk = jnp.zeros((W, Cin, W, Cout), jnp.float32)
        for kw in range(K):
            d = jnp.eye(W, W, k=ph - kw, dtype=jnp.float32)   # [w_in, w_out]
            blk = blk + d[:, None, :, None] * \
                w_hwio[kh, kw][None, :, None, :].astype(jnp.float32)
        blocks.append(blk.reshape(W * Cin, W * Cout))
    return jnp.concatenate(blocks, axis=0)


def conv_block_forward(x_nchw, params):
    """x_nchw: (N, Cin, H, W) float32 -> (N, Cout, H, W) float32."""
    N, Cin, H, W = x_nchw.shape
    K = params["w1"].shape[0]
    Cout = params["w1"].shape[3]
    cin_p = ((Cin + 7) // 8) * 8          # pad channels -> lane-dense operand

    # layout glue only: NCHW -> NHWC (zero-padded channels) -> (N*H, W*Cin_p)
    x_nhwc = jnp.transpose(x_nchw, (0, 2, 3, 1)).astype(jnp.float32)
    if cin_p != Cin:
        x_nhwc = jnp.pad(x_nhwc, ((0, 0), (0, 0), (0, 0), (0, cin_p - Cin)))
    x2d = x_nhwc.reshape(N * H, W * cin_p)

    # per-kh block-Toeplitz weight slabs, bf16 for the MXU
    w1 = params["w1"].astype(jnp.float32)
    if cin_p != Cin:
        w1 = jnp.pad(w1, ((0, 0), (0, 0), (0, cin_p - Cin), (0, 0)))
    w1_big = _build_big_weight(w1, W).astype(jnp.bfloat16)            # (K*W*Cin_p, W*Cout)
    w2_big = _build_big_weight(params["w2"], W).astype(jnp.bfloat16)  # (K*W*Cout , W*Cout)

    def chan(p):  # per-channel BN param as a (1, Cout) f32 row
        return p.reshape(1, Cout).astype(jnp.float32)

    kernel = _make_conv_block_kernel(N, H, W, K, cin_p, Cout)
    vmem = pl.BlockSpec(memory_space=pltpu.MemorySpace.VMEM)

    out2d = pl.pallas_call(
        kernel,
        out_shape=jax.ShapeDtypeStruct((N * H, W * Cout), jnp.float32),
        in_specs=[vmem] * 7,
        out_specs=vmem,
    )(x2d, w1_big, w2_big,
      chan(params["g1"]), chan(params["be1"]),
      chan(params["g2"]), chan(params["be2"]))

    # lane-dense (N*H, W*Cout) -> NCHW
    return jnp.transpose(out2d.reshape(N, H, W, Cout), (0, 3, 1, 2))


# ---------------------------------------------------------------------------
# Plain-JAX reference (PyTorch forward semantics, train-mode BatchNorm, f32)
# ---------------------------------------------------------------------------
def ref_conv_block(x_nchw, params):
    K = params["w1"].shape[0]
    ph = K // 2

    def conv(x, w_hwio, b):
        w_oihw = jnp.transpose(w_hwio, (3, 2, 0, 1))
        y = lax.conv_general_dilated(
            x, w_oihw, window_strides=(1, 1),
            padding=[(ph, ph), (ph, ph)],
            dimension_numbers=("NCHW", "OIHW", "NCHW"))
        return y + b.reshape(1, -1, 1, 1)

    def bn_relu(y, g, be):
        m = y.mean(axis=(0, 2, 3), keepdims=True)
        v = ((y - m) ** 2).mean(axis=(0, 2, 3), keepdims=True)
        out = (y - m) / jnp.sqrt(v + EPS) * g.reshape(1, -1, 1, 1) \
            + be.reshape(1, -1, 1, 1)
        return jnp.maximum(out, 0.0)

    h = bn_relu(conv(x_nchw, params["w1"], params["b1"]),
                params["g1"], params["be1"])
    return bn_relu(conv(h, params["w2"], params["b2"]),
                   params["g2"], params["be2"])


if __name__ == "__main__":
    # small shapes consistent with the module: batch=2, in_ch=4, out_ch=8,
    # spatial 16x16, kernel=3 (pad=1)
    N, Cin, Cout, H, W, K = 2, 4, 8, 16, 16, 3

    key = jax.random.PRNGKey(0)
    kx, kw1, kb1, kw2, kb2 = jax.random.split(key, 5)

    x = jax.random.normal(kx, (N, Cin, H, W), jnp.float32)
    params = {
        "w1": jax.random.normal(kw1, (K, K, Cin, Cout), jnp.float32) * 0.1,
        "b1": jax.random.normal(kb1, (1, Cout), jnp.float32) * 0.1,
        "g1": jnp.ones((1, Cout), jnp.float32),    # BatchNorm2d gamma init
        "be1": jnp.zeros((1, Cout), jnp.float32),  # BatchNorm2d beta init
        "w2": jax.random.normal(kw2, (K, K, Cout, Cout), jnp.float32) * 0.1,
        "b2": jax.random.normal(kb2, (1, Cout), jnp.float32) * 0.1,
        "g2": jnp.ones((1, Cout), jnp.float32),
        "be2": jnp.zeros((1, Cout), jnp.float32),
    }

    fwd = jax.jit(conv_block_forward)
    out = jax.block_until_ready(fwd(x, params))
    ref = jax.block_until_ready(ref_conv_block(x, params))

    assert out.shape == (N, Cout, H, W)
    # tolerance sized for bf16 MXU operands vs. the full-f32 reference
    max_err = float(jnp.max(jnp.abs(out - ref)))
    assert jnp.allclose(out, ref, atol=5e-2, rtol=5e-2), max_err

    print("KERNEL_OK")
</pallas_src>

<mosaic_0001>
module attributes {stable_mosaic.version = 11 : i64} {
  func.func @kernel(%arg0: memref<32x128xf32, #tpu.memory_space<vmem>>, %arg1: memref<384x128xbf16, #tpu.memory_space<vmem>>, %arg2: memref<384x128xbf16, #tpu.memory_space<vmem>>, %arg3: memref<1x8xf32, #tpu.memory_space<vmem>>, %arg4: memref<1x8xf32, #tpu.memory_space<vmem>>, %arg5: memref<1x8xf32, #tpu.memory_space<vmem>>, %arg6: memref<1x8xf32, #tpu.memory_space<vmem>>, %arg7: memref<32x128xf32, #tpu.memory_space<vmem>>) attributes {dimension_semantics = [], scalar_prefetch = 0 : i64, scratch_operands = 0 : i64, tpu.core_type = #tpu.core_type<tc>} {
    %0 = tpu.iota {dimensions = array<i32: 0>} : vector<8x128xi32>
    %1 = tpu.iota {dimensions = array<i32: 1>} : vector<8x128xi32>
    %c8_i32 = arith.constant 8 : i32
    %c0_i32 = arith.constant 0 : i32
    %2 = arith.cmpi eq, %c8_i32, %c0_i32 : i32
    %c1_i32 = arith.constant 1 : i32
    %3 = arith.select %2, %c1_i32, %c8_i32 : i32
    %4 = vector.broadcast %3 : i32 to vector<8x128xi32>
    %5 = arith.remsi %1, %4 : vector<8x128xi32>
    %c0_i32_0 = arith.constant 0 : i32
    %6 = vector.broadcast %c0_i32_0 : i32 to vector<8x128xi32>
    %7 = arith.cmpi ne, %5, %6 : vector<8x128xi32>
    %c0_i32_1 = arith.constant 0 : i32
    %8 = vector.broadcast %c0_i32_1 : i32 to vector<8x128xi32>
    %9 = arith.cmpi slt, %5, %8 : vector<8x128xi32>
    %c0_i32_2 = arith.constant 0 : i32
    %10 = arith.cmpi slt, %3, %c0_i32_2 : i32
    %11 = vector.broadcast %10 : i1 to vector<8x128xi1>
    %12 = vector.broadcast %11 : vector<8x128xi1> to vector<8x128xi1>
    %13 = arith.xori %9, %12 : vector<8x128xi1>
    %14 = arith.andi %13, %7 : vector<8x128xi1>
    %15 = vector.broadcast %3 : i32 to vector<8x128xi32>
    %16 = arith.addi %5, %15 : vector<8x128xi32>
    %17 = arith.select %14, %16, %5 : vector<8x128xi1>, vector<8x128xi32>
    %18 = arith.cmpi eq, %17, %0 : vector<8x128xi32>
    %19 = arith.extui %18 : vector<8x128xi1> to vector<8x128xi32>
    %20 = arith.sitofp %19 : vector<8x128xi32> to vector<8x128xf32>
    %21 = tpu.iota {dimensions = array<i32: 0>} : vector<128x8xi32>
    %22 = tpu.iota {dimensions = array<i32: 1>} : vector<128x8xi32>
    %c8_i32_3 = arith.constant 8 : i32
    %c0_i32_4 = arith.constant 0 : i32
    %23 = arith.cmpi eq, %c8_i32_3, %c0_i32_4 : i32
    %c1_i32_5 = arith.constant 1 : i32
    %24 = arith.select %23, %c1_i32_5, %c8_i32_3 : i32
    %25 = vector.broadcast %24 : i32 to vector<128x8xi32>
    %26 = arith.remsi %21, %25 : vector<128x8xi32>
    %c0_i32_6 = arith.constant 0 : i32
    %27 = vector.broadcast %c0_i32_6 : i32 to vector<128x8xi32>
    %28 = arith.cmpi ne, %26, %27 : vector<128x8xi32>
    %c0_i32_7 = arith.constant 0 : i32
    %29 = vector.broadcast %c0_i32_7 : i32 to vector<128x8xi32>
    %30 = arith.cmpi slt, %26, %29 : vector<128x8xi32>
    %c0_i32_8 = arith.constant 0 : i32
    %31 = arith.cmpi slt, %24, %c0_i32_8 : i32
    %32 = vector.broadcast %31 : i1 to vector<128x8xi1>
    %33 = vector.broadcast %32 : vector<128x8xi1> to vector<128x8xi1>
    %34 = arith.xori %30, %33 : vector<128x8xi1>
    %35 = arith.andi %34, %28 : vector<128x8xi1>
    %36 = vector.broadcast %24 : i32 to vector<128x8xi32>
    %37 = arith.addi %26, %36 : vector<128x8xi32>
    %38 = arith.select %35, %37, %26 : vector<128x8xi1>, vector<128x8xi32>
    %39 = arith.cmpi eq, %38, %22 : vector<128x8xi32>
    %40 = arith.extui %39 : vector<128x8xi1> to vector<128x8xi32>
    %41 = arith.sitofp %40 : vector<128x8xi32> to vector<128x8xf32>
    %c0 = arith.constant 0 : index
    %c0_9 = arith.constant 0 : index
    %42 = vector.load %arg0[%c0, %c0_9] : memref<32x128xf32, #tpu.memory_space<vmem>>, vector<32x128xf32>
    %43 = tpu.iota {dimensions = array<i32: 0>} : vector<32x128xi32>
    %c16_i32 = arith.constant 16 : i32
    %c0_i32_10 = arith.constant 0 : i32
    %44 = arith.cmpi eq, %c16_i32, %c0_i32_10 : i32
    %c1_i32_11 = arith.constant 1 : i32
    %45 = arith.select %44, %c1_i32_11, %c16_i32 : i32
    %46 = vector.broadcast %45 : i32 to vector<32x128xi32>
    %47 = arith.remsi %43, %46 : vector<32x128xi32>
    %c0_i32_12 = arith.constant 0 : i32
    %48 = vector.broadcast %c0_i32_12 : i32 to vector<32x128xi32>
    %49 = arith.cmpi ne, %47, %48 : vector<32x128xi32>
    %c0_i32_13 = arith.constant 0 : i32
    %50 = vector.broadcast %c0_i32_13 : i32 to vector<32x128xi32>
    %51 = arith.cmpi slt, %47, %50 : vector<32x128xi32>
    %c0_i32_14 = arith.constant 0 : i32
    %52 = arith.cmpi slt, %45, %c0_i32_14 : i32
    %53 = vector.broadcast %52 : i1 to vector<32x128xi1>
    %54 = vector.broadcast %53 : vector<32x128xi1> to vector<32x128xi1>
    %55 = arith.xori %51, %54 : vector<32x128xi1>
    %56 = arith.andi %55, %49 : vector<32x128xi1>
    %57 = vector.broadcast %45 : i32 to vector<32x128xi32>
    %58 = arith.addi %47, %57 : vector<32x128xi32>
    %59 = arith.select %56, %58, %47 : vector<32x128xi1>, vector<32x128xi32>
    %60 = arith.truncf %42 : vector<32x128xf32> to vector<32x128xbf16>
    %c128 = arith.constant 128 : index
    %c0_15 = arith.constant 0 : index
    %61 = vector.load %arg1[%c128, %c0_15] : memref<384x128xbf16, #tpu.memory_space<vmem>>, vector<128x128xbf16>
    %cst = arith.constant dense<0.000000e+00> : vector<32x128xf32>
    %62 = tpu.matmul %60, %61, %cst {dimension_numbers = #tpu.dot_dimension_numbers<[1], [0], [0], [1], [0, 0, 1, 1], [], []>} : vector<32x128xbf16>, vector<128x128xbf16>, vector<32x128xf32> -> vector<32x128xf32>
    %c-1_i32 = arith.constant -1 : i32
    %63 = vector.broadcast %c-1_i32 : i32 to vector<32x128xi32>
    %64 = arith.addi %59, %63 : vector<32x128xi32>
    %c0_i32_16 = arith.constant 0 : i32
    %65 = vector.broadcast %c0_i32_16 : i32 to vector<32x128xi32>
    %66 = arith.cmpi sge, %64, %65 : vector<32x128xi32>
    %c-1_i32_17 = arith.constant -1 : i32
    %67 = vector.broadcast %c-1_i32_17 : i32 to vector<32x128xi32>
    %68 = arith.addi %59, %67 : vector<32x128xi32>
    %c16_i32_18 = arith.constant 16 : i32
    %69 = vector.broadcast %c16_i32_18 : i32 to vector<32x128xi32>
    %70 = arith.cmpi slt, %68, %69 : vector<32x128xi32>
    %71 = arith.andi %66, %70 : vector<32x128xi1>
    %c1_i32_19 = arith.constant 1 : i32
    %72 = tpu.dynamic_rotate %42 by %c1_i32_19 dim 0 : vector<32x128xf32>, i32 -> vector<32x128xf32>
    %cst_20 = arith.constant 0.000000e+00 : f32
    %73 = vector.broadcast %cst_20 : f32 to vector<32x128xf32>
    %74 = arith.select %71, %72, %73 : vector<32x128xi1>, vector<32x128xf32>
    %75 = arith.truncf %74 : vector<32x128xf32> to vector<32x128xbf16>
    %c0_21 = arith.constant 0 : index
    %c0_22 = arith.constant 0 : index
    %76 = vector.load %arg1[%c0_21, %c0_22] : memref<384x128xbf16, #tpu.memory_space<vmem>>, vector<128x128xbf16>
    %cst_23 = arith.constant dense<0.000000e+00> : vector<32x128xf32>
    %77 = tpu.matmul %75, %76, %cst_23 {dimension_numbers = #tpu.dot_dimension_numbers<[1], [0], [0], [1], [0, 0, 1, 1], [], []>} : vector<32x128xbf16>, vector<128x128xbf16>, vector<32x128xf32> -> vector<32x128xf32>
    %78 = arith.addf %62, %77 : vector<32x128xf32>
    %c1_i32_24 = arith.constant 1 : i32
    %79 = vector.broadcast %c1_i32_24 : i32 to vector<32x128xi32>
    %80 = arith.addi %59, %79 : vector<32x128xi32>
    %c0_i32_25 = arith.constant 0 : i32
    %81 = vector.broadcast %c0_i32_25 : i32 to vector<32x128xi32>
    %82 = arith.cmpi sge, %80, %81 : vector<32x128xi32>
    %c1_i32_26 = arith.constant 1 : i32
    %83 = vector.broadcast %c1_i32_26 : i32 to vector<32x128xi32>
    %84 = arith.addi %59, %83 : vector<32x128xi32>
    %c16_i32_27 = arith.constant 16 : i32
    %85 = vector.broadcast %c16_i32_27 : i32 to vector<32x128xi32>
    %86 = arith.cmpi slt, %84, %85 : vector<32x128xi32>
    %87 = arith.andi %82, %86 : vector<32x128xi1>
    %c31_i32 = arith.constant 31 : i32
    %88 = tpu.dynamic_rotate %42 by %c31_i32 dim 0 : vector<32x128xf32>, i32 -> vector<32x128xf32>
    %cst_28 = arith.constant 0.000000e+00 : f32
    %89 = vector.broadcast %cst_28 : f32 to vector<32x128xf32>
    %90 = arith.select %87, %88, %89 : vector<32x128xi1>, vector<32x128xf32>
    %91 = arith.truncf %90 : vector<32x128xf32> to vector<32x128xbf16>
    %c256 = arith.constant 256 : index
    %c0_29 = arith.constant 0 : index
    %92 = vector.load %arg1[%c256, %c0_29] : memref<384x128xbf16, #tpu.memory_space<vmem>>, vector<128x128xbf16>
    %cst_30 = arith.constant dense<0.000000e+00> : vector<32x128xf32>
    %93 = tpu.matmul %91, %92, %cst_30 {dimension_numbers = #tpu.dot_dimension_numbers<[1], [0], [0], [1], [0, 0, 1, 1], [], []>} : vector<32x128xbf16>, vector<128x128xbf16>, vector<32x128xf32> -> vector<32x128xf32>
    %94 = arith.addf %78, %93 : vector<32x128xf32>
    %c0_31 = arith.constant 0 : index
    %c0_32 = arith.constant 0 : index
    %95 = vector.load %arg3[%c0_31, %c0_32] : memref<1x8xf32, #tpu.memory_space<vmem>>, vector<1x8xf32>
    %c0_33 = arith.constant 0 : index
    %c0_34 = arith.constant 0 : index
    %96 = vector.load %arg4[%c0_33, %c0_34] : memref<1x8xf32, #tpu.memory_space<vmem>>, vector<1x8xf32>
    %cst_35 = arith.constant dense<0.000000e+00> : vector<128xf32>
    %97 = vector.multi_reduction <add>, %94, %cst_35 [0] : vector<32x128xf32> to vector<128xf32>
    %98 = vector.shape_cast %97 : vector<128xf32> to vector<1x128xf32>
    %99 = arith.mulf %94, %94 : vector<32x128xf32>
    %cst_36 = arith.constant dense<0.000000e+00> : vector<128xf32>
    %100 = vector.multi_reduction <add>, %99, %cst_36 [0] : vector<32x128xf32> to vector<128xf32>
    %101 = vector.shape_cast %100 : vector<128xf32> to vector<1x128xf32>
    %cst_37 = arith.constant dense<0.000000e+00> : vector<1x8xf32>
    %102 = tpu.matmul %98, %41, %cst_37 {dimension_numbers = #tpu.dot_dimension_numbers<[1], [0], [0], [1], [0, 0, 1, 1], [], []>} : vector<1x128xf32>, vector<128x8xf32>, vector<1x8xf32> -> vector<1x8xf32>
    %cst_38 = arith.constant 0.001953125 : f32
    %103 = vector.broadcast %cst_38 : f32 to vector<1x8xf32>
    %104 = arith.mulf %102, %103 : vector<1x8xf32>
    %cst_39 = arith.constant dense<0.000000e+00> : vector<1x8xf32>
    %105 = tpu.matmul %101, %41, %cst_39 {dimension_numbers = #tpu.dot_dimension_numbers<[1], [0], [0], [1], [0, 0, 1, 1], [], []>} : vector<1x128xf32>, vector<128x8xf32>, vector<1x8xf32> -> vector<1x8xf32>
    %cst_40 = arith.constant 0.001953125 : f32
    %106 = vector.broadcast %cst_40 : f32 to vector<1x8xf32>
    %107 = arith.mulf %105, %106 : vector<1x8xf32>
    %108 = arith.mulf %104, %104 : vector<1x8xf32>
    %109 = arith.subf %107, %108 : vector<1x8xf32>
    %cst_41 = arith.constant 9.99999974E-6 : f32
    %110 = vector.broadcast %cst_41 : f32 to vector<1x8xf32>
    %111 = arith.addf %109, %110 : vector<1x8xf32>
    %112 = math.rsqrt %111 : vector<1x8xf32>
    %113 = arith.mulf %112, %95 : vector<1x8xf32>
    %114 = arith.mulf %104, %113 : vector<1x8xf32>
    %115 = arith.subf %96, %114 : vector<1x8xf32>
    %cst_42 = arith.constant dense<0.000000e+00> : vector<1x128xf32>
    %116 = tpu.matmul %113, %20, %cst_42 {dimension_numbers = #tpu.dot_dimension_numbers<[1], [0], [0], [1], [0, 0, 1, 1], [], []>} : vector<1x8xf32>, vector<8x128xf32>, vector<1x128xf32> -> vector<1x128xf32>
    %cst_43 = arith.constant dense<0.000000e+00> : vector<1x128xf32>
    %117 = tpu.matmul %115, %20, %cst_43 {dimension_numbers = #tpu.dot_dimension_numbers<[1], [0], [0], [1], [0, 0, 1, 1], [], []>} : vector<1x8xf32>, vector<8x128xf32>, vector<1x128xf32> -> vector<1x128xf32>
    %118 = vector.broadcast %116 : vector<1x128xf32> to vector<32x128xf32>
    %119 = arith.mulf %94, %118 : vector<32x128xf32>
    %120 = vector.broadcast %117 : vector<1x128xf32> to vector<32x128xf32>
    %121 = arith.addf %119, %120 : vector<32x128xf32>
    %cst_44 = arith.constant 0.000000e+00 : f32
    %122 = vector.broadcast %cst_44 : f32 to vector<32x128xf32>
    %123 = arith.maximumf %121, %122 : vector<32x128xf32>
    %124 = tpu.iota {dimensions = array<i32: 0>} : vector<32x128xi32>
    %c16_i32_45 = arith.constant 16 : i32
    %c0_i32_46 = arith.constant 0 : i32
    %125 = arith.cmpi eq, %c16_i32_45, %c0_i32_46 : i32
    %c1_i32_47 = arith.constant 1 : i32
    %126 = arith.select %125, %c1_i32_47, %c16_i32_45 : i32
    %127 = vector.broadcast %126 : i32 to vector<32x128xi32>
    %128 = arith.remsi %124, %127 : vector<32x128xi32>
    %c0_i32_48 = arith.constant 0 : i32
    %129 = vector.broadcast %c0_i32_48 : i32 to vector<32x128xi32>
    %130 = arith.cmpi ne, %128, %129 : vector<32x128xi32>
    %c0_i32_49 = arith.constant 0 : i32
    %131 = vector.broadcast %c0_i32_49 : i32 to vector<32x128xi32>
    %132 = arith.cmpi slt, %128, %131 : vector<32x128xi32>
    %c0_i32_50 = arith.constant 0 : i32
    %133 = arith.cmpi slt, %126, %c0_i32_50 : i32
    %134 = vector.broadcast %133 : i1 to vector<32x128xi1>
    %135 = vector.broadcast %134 : vector<32x128xi1> to vector<32x128xi1>
    %136 = arith.xori %132, %135 : vector<32x128xi1>
    %137 = arith.andi %136, %130 : vector<32x128xi1>
    %138 = vector.broadcast %126 : i32 to vector<32x128xi32>
    %139 = arith.addi %128, %138 : vector<32x128xi32>
    %140 = arith.select %137, %139, %128 : vector<32x128xi1>, vector<32x128xi32>
    %141 = arith.truncf %123 : vector<32x128xf32> to vector<32x128xbf16>
    %c128_51 = arith.constant 128 : index
    %c0_52 = arith.constant 0 : index
    %142 = vector.load %arg2[%c128_51, %c0_52] : memref<384x128xbf16, #tpu.memory_space<vmem>>, vector<128x128xbf16>
    %cst_53 = arith.constant dense<0.000000e+00> : vector<32x128xf32>
    %143 = tpu.matmul %141, %142, %cst_53 {dimension_numbers = #tpu.dot_dimension_numbers<[1], [0], [0], [1], [0, 0, 1, 1], [], []>} : vector<32x128xbf16>, vector<128x128xbf16>, vector<32x128xf32> -> vector<32x128xf32>
    %c-1_i32_54 = arith.constant -1 : i32
    %144 = vector.broadcast %c-1_i32_54 : i32 to vector<32x128xi32>
    %145 = arith.addi %140, %144 : vector<32x128xi32>
    %c0_i32_55 = arith.constant 0 : i32
    %146 = vector.broadcast %c0_i32_55 : i32 to vector<32x128xi32>
    %147 = arith.cmpi sge, %145, %146 : vector<32x128xi32>
    %c-1_i32_56 = arith.constant -1 : i32
    %148 = vector.broadcast %c-1_i32_56 : i32 to vector<32x128xi32>
    %149 = arith.addi %140, %148 : vector<32x128xi32>
    %c16_i32_57 = arith.constant 16 : i32
    %150 = vector.broadcast %c16_i32_57 : i32 to vector<32x128xi32>
    %151 = arith.cmpi slt, %149, %150 : vector<32x128xi32>
    %152 = arith.andi %147, %151 : vector<32x128xi1>
    %c1_i32_58 = arith.constant 1 : i32
    %153 = tpu.dynamic_rotate %123 by %c1_i32_58 dim 0 : vector<32x128xf32>, i32 -> vector<32x128xf32>
    %cst_59 = arith.constant 0.000000e+00 : f32
    %154 = vector.broadcast %cst_59 : f32 to vector<32x128xf32>
    %155 = arith.select %152, %153, %154 : vector<32x128xi1>, vector<32x128xf32>
    %156 = arith.truncf %155 : vector<32x128xf32> to vector<32x128xbf16>
    %c0_60 = arith.constant 0 : index
    %c0_61 = arith.constant 0 : index
    %157 = vector.load %arg2[%c0_60, %c0_61] : memref<384x128xbf16, #tpu.memory_space<vmem>>, vector<128x128xbf16>
    %cst_62 = arith.constant dense<0.000000e+00> : vector<32x128xf32>
    %158 = tpu.matmul %156, %157, %cst_62 {dimension_numbers = #tpu.dot_dimension_numbers<[1], [0], [0], [1], [0, 0, 1, 1], [], []>} : vector<32x128xbf16>, vector<128x128xbf16>, vector<32x128xf32> -> vector<32x128xf32>
    %159 = arith.addf %143, %158 : vector<32x128xf32>
    %c1_i32_63 = arith.constant 1 : i32
    %160 = vector.broadcast %c1_i32_63 : i32 to vector<32x128xi32>
    %161 = arith.addi %140, %160 : vector<32x128xi32>
    %c0_i32_64 = arith.constant 0 : i32
    %162 = vector.broadcast %c0_i32_64 : i32 to vector<32x128xi32>
    %163 = arith.cmpi sge, %161, %162 : vector<32x128xi32>
    %c1_i32_65 = arith.constant 1 : i32
    %164 = vector.broadcast %c1_i32_65 : i32 to vector<32x128xi32>
    %165 = arith.addi %140, %164 : vector<32x128xi32>
    %c16_i32_66 = arith.constant 16 : i32
    %166 = vector.broadcast %c16_i32_66 : i32 to vector<32x128xi32>
    %167 = arith.cmpi slt, %165, %166 : vector<32x128xi32>
    %168 = arith.andi %163, %167 : vector<32x128xi1>
    %c31_i32_67 = arith.constant 31 : i32
    %169 = tpu.dynamic_rotate %123 by %c31_i32_67 dim 0 : vector<32x128xf32>, i32 -> vector<32x128xf32>
    %cst_68 = arith.constant 0.000000e+00 : f32
    %170 = vector.broadcast %cst_68 : f32 to vector<32x128xf32>
    %171 = arith.select %168, %169, %170 : vector<32x128xi1>, vector<32x128xf32>
    %172 = arith.truncf %171 : vector<32x128xf32> to vector<32x128xbf16>
    %c256_69 = arith.constant 256 : index
    %c0_70 = arith.constant 0 : index
    %173 = vector.load %arg2[%c256_69, %c0_70] : memref<384x128xbf16, #tpu.memory_space<vmem>>, vector<128x128xbf16>
    %cst_71 = arith.constant dense<0.000000e+00> : vector<32x128xf32>
    %174 = tpu.matmul %172, %173, %cst_71 {dimension_numbers = #tpu.dot_dimension_numbers<[1], [0], [0], [1], [0, 0, 1, 1], [], []>} : vector<32x128xbf16>, vector<128x128xbf16>, vector<32x128xf32> -> vector<32x128xf32>
    %175 = arith.addf %159, %174 : vector<32x128xf32>
    %c0_72 = arith.constant 0 : index
    %c0_73 = arith.constant 0 : index
    %176 = vector.load %arg5[%c0_72, %c0_73] : memref<1x8xf32, #tpu.memory_space<vmem>>, vector<1x8xf32>
    %c0_74 = arith.constant 0 : index
    %c0_75 = arith.constant 0 : index
    %177 = vector.load %arg6[%c0_74, %c0_75] : memref<1x8xf32, #tpu.memory_space<vmem>>, vector<1x8xf32>
    %cst_76 = arith.constant dense<0.000000e+00> : vector<128xf32>
    %178 = vector.multi_reduction <add>, %175, %cst_76 [0] : vector<32x128xf32> to vector<128xf32>
    %179 = vector.shape_cast %178 : vector<128xf32> to vector<1x128xf32>
    %180 = arith.mulf %175, %175 : vector<32x128xf32>
    %cst_77 = arith.constant dense<0.000000e+00> : vector<128xf32>
    %181 = vector.multi_reduction <add>, %180, %cst_77 [0] : vector<32x128xf32> to vector<128xf32>
    %182 = vector.shape_cast %181 : vector<128xf32> to vector<1x128xf32>
    %cst_78 = arith.constant dense<0.000000e+00> : vector<1x8xf32>
    %183 = tpu.matmul %179, %41, %cst_78 {dimension_numbers = #tpu.dot_dimension_numbers<[1], [0], [0], [1], [0, 0, 1, 1], [], []>} : vector<1x128xf32>, vector<128x8xf32>, vector<1x8xf32> -> vector<1x8xf32>
    %cst_79 = arith.constant 0.001953125 : f32
    %184 = vector.broadcast %cst_79 : f32 to vector<1x8xf32>
    %185 = arith.mulf %183, %184 : vector<1x8xf32>
    %cst_80 = arith.constant dense<0.000000e+00> : vector<1x8xf32>
    %186 = tpu.matmul %182, %41, %cst_80 {dimension_numbers = #tpu.dot_dimension_numbers<[1], [0], [0], [1], [0, 0, 1, 1], [], []>} : vector<1x128xf32>, vector<128x8xf32>, vector<1x8xf32> -> vector<1x8xf32>
    %cst_81 = arith.constant 0.001953125 : f32
    %187 = vector.broadcast %cst_81 : f32 to vector<1x8xf32>
    %188 = arith.mulf %186, %187 : vector<1x8xf32>
    %189 = arith.mulf %185, %185 : vector<1x8xf32>
    %190 = arith.subf %188, %189 : vector<1x8xf32>
    %cst_82 = arith.constant 9.99999974E-6 : f32
    %191 = vector.broadcast %cst_82 : f32 to vector<1x8xf32>
    %192 = arith.addf %190, %191 : vector<1x8xf32>
    %193 = math.rsqrt %192 : vector<1x8xf32>
    %194 = arith.mulf %193, %176 : vector<1x8xf32>
    %195 = arith.mulf %185, %194 : vector<1x8xf32>
    %196 = arith.subf %177, %195 : vector<1x8xf32>
    %cst_83 = arith.constant dense<0.000000e+00> : vector<1x128xf32>
    %197 = tpu.matmul %194, %20, %cst_83 {dimension_numbers = #tpu.dot_dimension_numbers<[1], [0], [0], [1], [0, 0, 1, 1], [], []>} : vector<1x8xf32>, vector<8x128xf32>, vector<1x128xf32> -> vector<1x128xf32>
    %cst_84 = arith.constant dense<0.000000e+00> : vector<1x128xf32>
    %198 = tpu.matmul %196, %20, %cst_84 {dimension_numbers = #tpu.dot_dimension_numbers<[1], [0], [0], [1], [0, 0, 1, 1], [], []>} : vector<1x8xf32>, vector<8x128xf32>, vector<1x128xf32> -> vector<1x128xf32>
    %199 = vector.broadcast %197 : vector<1x128xf32> to vector<32x128xf32>
    %200 = arith.mulf %175, %199 : vector<32x128xf32>
    %201 = vector.broadcast %198 : vector<1x128xf32> to vector<32x128xf32>
    %202 = arith.addf %200, %201 : vector<32x128xf32>
    %cst_85 = arith.constant 0.000000e+00 : f32
    %203 = vector.broadcast %cst_85 : f32 to vector<32x128xf32>
    %204 = arith.maximumf %202, %203 : vector<32x128xf32>
    %c0_86 = arith.constant 0 : index
    %c0_87 = arith.constant 0 : index
    %205 = vector.load %arg7[%c0_86, %c0_87] : memref<32x128xf32, #tpu.memory_space<vmem>>, vector<32x128xf32>
    tpu.vector_store %arg7[%c0_86, %c0_87], %204 {strides = array<i32>} : memref<32x128xf32, #tpu.memory_space<vmem>>, vector<32x128xf32>,
    return
  }
}

</mosaic_0001>

<llo_original>
// kernel: conv_block_forward.1
$region0: #{conv_block_forward.1}
  #allocation0 [shape = 'u32[]', space=smem, size = 0x4, offset = 0x4, fixed_abs, tag = 'smem constant byte address 0x4 - core index']
  #allocation1 [shape = 'u32[144,128]{1,0:T(1,128)}', space=vmem, size = 0x12000, scoped, tag = 'internal scratch']
  %s0 = inlined_call_operand.vmem [shape: f32[32,128], index: 0, kind: input, shape index: {}]
  %s1 = inlined_call_operand.vmem [shape: bf16[384,128], index: 1, kind: input, shape index: {}]
  %s2 = inlined_call_operand.vmem [shape: bf16[384,128], index: 2, kind: input, shape index: {}]
  %s3 = inlined_call_operand.vmem [shape: f32[1,8], index: 3, kind: input, shape index: {}]
  %s4 = inlined_call_operand.vmem [shape: f32[1,8], index: 4, kind: input, shape index: {}]
  %s5 = inlined_call_operand.vmem [shape: f32[1,8], index: 5, kind: input, shape index: {}]
  %s6 = inlined_call_operand.vmem [shape: f32[1,8], index: 6, kind: input, shape index: {}]
  %s7 = inlined_call_operand.vmem [shape: f32[32,128], index: 7, kind: output, shape index: {}]
  %s8 = sld [smem:[#allocation0]]
  $region38: #{conv_block_forward.1} parent=0
    _
  %s10 = ssub.s32 1, %s8
  %s11 = scalar_select 0, %s10, %s8
  // Predicated region
  $region2: #{conv_block_forward.1} parent=0 // pred_check
    _
  $region3: #{conv_block_forward.1} parent=0 // pred_check_branch
    %13 = sbr.rel (0) target = $region5
  $region4: #{conv_block_forward.1} parent=0 // pred_region
    _
  $region5: #{conv_block_forward.1} parent=0 // pred_fallthru
    _
  // Predicated region
  $region6: #{conv_block_forward.1} parent=0 // pred_check
    _
  $region7: #{conv_block_forward.1} parent=0 // pred_check_branch
    %15 = sbr.rel (0) target = $region9
  $region8: #{conv_block_forward.1} parent=0 // pred_region
    _
  $region9: #{conv_block_forward.1} parent=0 // pred_fallthru
    _
  // Predicated region
  $region10: #{conv_block_forward.1} parent=0 // pred_check
    _
  $region11: #{conv_block_forward.1} parent=0 // pred_check_branch
    %17 = sbr.rel (0) target = $region13
  $region12: #{conv_block_forward.1} parent=0 // pred_region
    _
  $region13: #{conv_block_forward.1} parent=0 // pred_fallthru
    _
  // Predicated region
  $region14: #{conv_block_forward.1} parent=0 // pred_check
    _
  $region15: #{conv_block_forward.1} parent=0 // pred_check_branch
    %19 = sbr.rel (0) target = $region17
  $region16: #{conv_block_forward.1} parent=0 // pred_region
    _
  $region17: #{conv_block_forward.1} parent=0 // pred_fallthru
    _
  // Predicated region
  $region18: #{conv_block_forward.1} parent=0 // pred_check
    _
  $region19: #{conv_block_forward.1} parent=0 // pred_check_branch
    %21 = sbr.rel (0) target = $region21
  $region20: #{conv_block_forward.1} parent=0 // pred_region
    _
  $region21: #{conv_block_forward.1} parent=0 // pred_fallthru
    _
  // Predicated region
  $region22: #{conv_block_forward.1} parent=0 // pred_check
    _
  $region23: #{conv_block_forward.1} parent=0 // pred_check_branch
    %23 = sbr.rel (0) target = $region25
  $region24: #{conv_block_forward.1} parent=0 // pred_region
    _
  $region25: #{conv_block_forward.1} parent=0 // pred_fallthru
    _
  // Predicated region
  $region26: #{conv_block_forward.1} parent=0 // pred_check
    _
  $region27: #{conv_block_forward.1} parent=0 // pred_check_branch
    %25 = sbr.rel (0) target = $region29
  $region28: #{conv_block_forward.1} parent=0 // pred_region
    _
  $region29: #{conv_block_forward.1} parent=0 // pred_fallthru
    _
  %v27 = vlaneseq
  %v28 = vshrl.u32 %v27, 7
  %v29 = vlaneseq
  %v30 = vand.u32 %v29, 127
  %vm31 = vcmp.lt.s32.totalorder %v30, 0
  %v32 = vsub.s32 0, %v30
  %v33 = vsel %vm31, %v32, %v30
  %v34 = vshrl.u32 %v33, 3
  %v35 = vand.u32 %v33, 7
  %v36 = vsub.s32 0, %v35
  %v37 = vsel %vm31, %v36, %v35
  %vm38 = vcmp.ne.s32.totalorder %v37, 0
  %vm39 = vcmp.lt.s32.totalorder %v37, 0
  %vm40 = vmand %vm39, %vm38
  %v41 = vadd.s32 %v37, 8
  %v42 = vsel %vm40, %v41, %v37
  %vm43 = vcmp.eq.s32.totalorder %v42, %v28
  %v44 = vsel %vm43, 1, 0
  %v45 = vcvt.s32.f32 %v44
  %v46 = vadd.s32 %v28, 8
  %v47 = vadd.s32 %v28, 16
  %v48 = vadd.s32 %v28, 24
  %v49 = vadd.s32 %v28, 32
  %v50 = vadd.s32 %v28, 40
  %v51 = vadd.s32 %v28, 48
  %v52 = vadd.s32 %v28, 56
  %v53 = vadd.s32 %v28, 64
  %v54 = vadd.s32 %v28, 72
  %v55 = vadd.s32 %v28, 80
  %v56 = vadd.s32 %v28, 88
  %v57 = vadd.s32 %v28, 96
  %v58 = vadd.s32 %v28, 104
  %v59 = vadd.s32 %v28, 112
  %v60 = vadd.s32 %v28, 120
  %vm61 = vcmp.lt.s32.totalorder %v28, 0
  %v62 = vsub.s32 0, %v28
  %v63 = vsel %vm61, %v62, %v28
  %v64 = vshrl.u32 %v63, 3
  %v65 = vand.u32 %v63, 7
  %v66 = vsub.s32 0, %v65
  %v67 = vsel %vm61, %v66, %v65
  %vm68 = vcmp.lt.s32.totalorder %v46, 0
  %v69 = vsub.s32 0, %v46
  %v70 = vsel %vm68, %v69, %v46
  %v71 = vshrl.u32 %v70, 3
  %v72 = vand.u32 %v70, 7
  %v73 = vsub.s32 0, %v72
  %v74 = vsel %vm68, %v73, %v72
  %vm75 = vcmp.lt.s32.totalorder %v47, 0
  %v76 = vsub.s32 0, %v47
  %v77 = vsel %vm75, %v76, %v47
  %v78 = vshrl.u32 %v77, 3
  %v79 = vand.u32 %v77, 7
  %v80 = vsub.s32 0, %v79
  %v81 = vsel %vm75, %v80, %v79
  %vm82 = vcmp.lt.s32.totalorder %v48, 0
  %v83 = vsub.s32 0, %v48
  %v84 = vsel %vm82, %v83, %v48
  %v85 = vshrl.u32 %v84, 3
  %v86 = vand.u32 %v84, 7
  %v87 = vsub.s32 0, %v86
  %v88 = vsel %vm82, %v87, %v86
  %vm89 = vcmp.lt.s32.totalorder %v49, 0
  %v90 = vsub.s32 0, %v49
  %v91 = vsel %vm89, %v90, %v49
  %v92 = vshrl.u32 %v91, 3
  %v93 = vand.u32 %v91, 7
  %v94 = vsub.s32 0, %v93
  %v95 = vsel %vm89, %v94, %v93
  %vm96 = vcmp.lt.s32.totalorder %v50, 0
  %v97 = vsub.s32 0, %v50
  %v98 = vsel %vm96, %v97, %v50
  %v99 = vshrl.u32 %v98, 3
  %v100 = vand.u32 %v98, 7
  %v101 = vsub.s32 0, %v100
  %v102 = vsel %vm96, %v101, %v100
  %vm103 = vcmp.lt.s32.totalorder %v51, 0
  %v104 = vsub.s32 0, %v51
  %v105 = vsel %vm103, %v104, %v51
  %v106 = vshrl.u32 %v105, 3
  %v107 = vand.u32 %v105, 7
  %v108 = vsub.s32 0, %v107
  %v109 = vsel %vm103, %v108, %v107
  %vm110 = vcmp.lt.s32.totalorder %v52, 0
  %v111 = vsub.s32 0, %v52
  %v112 = vsel %vm110, %v111, %v52
  %v113 = vshrl.u32 %v112, 3
  %v114 = vand.u32 %v112, 7
  %v115 = vsub.s32 0, %v114
  %v116 = vsel %vm110, %v115, %v114
  %vm117 = vcmp.lt.s32.totalorder %v53, 0
  %v118 = vsub.s32 0, %v53
  %v119 = vsel %vm117, %v118, %v53
  %v120 = vshrl.u32 %v119, 3
  %v121 = vand.u32 %v119, 7
  %v122 = vsub.s32 0, %v121
  %v123 = vsel %vm117, %v122, %v121
  %vm124 = vcmp.lt.s32.totalorder %v54, 0
  %v125 = vsub.s32 0, %v54
  %v126 = vsel %vm124, %v125, %v54
  %v127 = vshrl.u32 %v126, 3
  %v128 = vand.u32 %v126, 7
  %v129 = vsub.s32 0, %v128
  %v130 = vsel %vm124, %v129, %v128
  %vm131 = vcmp.lt.s32.totalorder %v55, 0
  %v132 = vsub.s32 0, %v55
  %v133 = vsel %vm131, %v132, %v55
  %v134 = vshrl.u32 %v133, 3
  %v135 = vand.u32 %v133, 7
  %v136 = vsub.s32 0, %v135
  %v137 = vsel %vm131, %v136, %v135
  %vm138 = vcmp.lt.s32.totalorder %v56, 0
  %v139 = vsub.s32 0, %v56
  %v140 = vsel %vm138, %v139, %v56
  %v141 = vshrl.u32 %v140, 3
  %v142 = vand.u32 %v140, 7
  %v143 = vsub.s32 0, %v142
  %v144 = vsel %vm138, %v143, %v142
  %vm145 = vcmp.lt.s32.totalorder %v57, 0
  %v146 = vsub.s32 0, %v57
  %v147 = vsel %vm145, %v146, %v57
  %v148 = vshrl.u32 %v147, 3
  %v149 = vand.u32 %v147, 7
  %v150 = vsub.s32 0, %v149
  %v151 = vsel %vm145, %v150, %v149
  %vm152 = vcmp.lt.s32.totalorder %v58, 0
  %v153 = vsub.s32 0, %v58
  %v154 = vsel %vm152, %v153, %v58
  %v155 = vshrl.u32 %v154, 3
  %v156 = vand.u32 %v154, 7
  %v157 = vsub.s32 0, %v156
  %v158 = vsel %vm152, %v157, %v156
  %vm159 = vcmp.lt.s32.totalorder %v59, 0
  %v160 = vsub.s32 0, %v59
  %v161 = vsel %vm159, %v160, %v59
  %v162 = vshrl.u32 %v161, 3
  %v163 = vand.u32 %v161, 7
  %v164 = vsub.s32 0, %v163
  %v165 = vsel %vm159, %v164, %v163
  %vm166 = vcmp.lt.s32.totalorder %v60, 0
  %v167 = vsub.s32 0, %v60
  %v168 = vsel %vm166, %v167, %v60
  %v169 = vshrl.u32 %v168, 3
  %v170 = vand.u32 %v168, 7
  %v171 = vsub.s32 0, %v170
  %v172 = vsel %vm166, %v171, %v170
  %vm173 = vcmp.ne.s32.totalorder %v67, 0
  %vm174 = vcmp.ne.s32.totalorder %v74, 0
  %vm175 = vcmp.ne.s32.totalorder %v81, 0
  %vm176 = vcmp.ne.s32.totalorder %v88, 0
  %vm177 = vcmp.ne.s32.totalorder %v95, 0
  %vm178 = vcmp.ne.s32.totalorder %v102, 0
  %vm179 = vcmp.ne.s32.totalorder %v109, 0
  %vm180 = vcmp.ne.s32.totalorder %v116, 0
  %vm181 = vcmp.ne.s32.totalorder %v123, 0
  %vm182 = vcmp.ne.s32.totalorder %v130, 0
  %vm183 = vcmp.ne.s32.totalorder %v137, 0
  %vm184 = vcmp.ne.s32.totalorder %v144, 0
  %vm185 = vcmp.ne.s32.totalorder %v151, 0
  %vm186 = vcmp.ne.s32.totalorder %v158, 0
  %vm187 = vcmp.ne.s32.totalorder %v165, 0
  %vm188 = vcmp.ne.s32.totalorder %v172, 0
  %vm189 = vcmp.lt.s32.totalorder %v67, 0
  %vm190 = vcmp.lt.s32.totalorder %v74, 0
  %vm191 = vcmp.lt.s32.totalorder %v81, 0
  %vm192 = vcmp.lt.s32.totalorder %v88, 0
  %vm193 = vcmp.lt.s32.totalorder %v95, 0
  %vm194 = vcmp.lt.s32.totalorder %v102, 0
  %vm195 = vcmp.lt.s32.totalorder %v109, 0
  %vm196 = vcmp.lt.s32.totalorder %v116, 0
  %vm197 = vcmp.lt.s32.totalorder %v123, 0
  %vm198 = vcmp.lt.s32.totalorder %v130, 0
  %vm199 = vcmp.lt.s32.totalorder %v137, 0
  %vm200 = vcmp.lt.s32.totalorder %v144, 0
  %vm201 = vcmp.lt.s32.totalorder %v151, 0
  %vm202 = vcmp.lt.s32.totalorder %v158, 0
  %vm203 = vcmp.lt.s32.totalorder %v165, 0
  %vm204 = vcmp.lt.s32.totalorder %v172, 0
  %vm205 = vmand %vm189, %vm173
  %vm206 = vmand %vm190, %vm174
  %vm207 = vmand %vm191, %vm175
  %vm208 = vmand %vm192, %vm176
  %vm209 = vmand %vm193, %vm177
  %vm210 = vmand %vm194, %vm178
  %vm211 = vmand %vm195, %vm179
  %vm212 = vmand %vm196, %vm180
  %vm213 = vmand %vm197, %vm181
  %vm214 = vmand %vm198, %vm182
  %vm215 = vmand %vm199, %vm183
  %vm216 = vmand %vm200, %vm184
  %vm217 = vmand %vm201, %vm185
  %vm218 = vmand %vm202, %vm186
  %vm219 = vmand %vm203, %vm187
  %vm220 = vmand %vm204, %vm188
  %v221 = vadd.s32 %v67, 8
  %v222 = vadd.s32 %v74, 8
  %v223 = vadd.s32 %v81, 8
  %v224 = vadd.s32 %v88, 8
  %v225 = vadd.s32 %v95, 8
  %v226 = vadd.s32 %v102, 8
  %v227 = vadd.s32 %v109, 8
  %v228 = vadd.s32 %v116, 8
  %v229 = vadd.s32 %v123, 8
  %v230 = vadd.s32 %v130, 8
  %v231 = vadd.s32 %v137, 8
  %v232 = vadd.s32 %v144, 8
  %v233 = vadd.s32 %v151, 8
  %v234 = vadd.s32 %v158, 8
  %v235 = vadd.s32 %v165, 8
  %v236 = vadd.s32 %v172, 8
  %v237 = vsel %vm205, %v221, %v67
  %v238 = vsel %vm206, %v222, %v74
  %v239 = vsel %vm207, %v223, %v81
  %v240 = vsel %vm208, %v224, %v88
  %v241 = vsel %vm209, %v225, %v95
  %v242 = vsel %vm210, %v226, %v102
  %v243 = vsel %vm211, %v227, %v109
  %v244 = vsel %vm212, %v228, %v116
  %v245 = vsel %vm213, %v229, %v123
  %v246 = vsel %vm214, %v230, %v130
  %v247 = vsel %vm215, %v231, %v137
  %v248 = vsel %vm216, %v232, %v144
  %v249 = vsel %vm217, %v233, %v151
  %v250 = vsel %vm218, %v234, %v158
  %v251 = vsel %vm219, %v235, %v165
  %v252 = vsel %vm220, %v236, %v172
  %vm253 = vcmp.eq.s32.totalorder %v237, %v30
  %vm254 = vcmp.eq.s32.totalorder %v238, %v30
  %vm255 = vcmp.eq.s32.totalorder %v239, %v30
  %vm256 = vcmp.eq.s32.totalorder %v240, %v30
  %vm257 = vcmp.eq.s32.totalorder %v241, %v30
  %vm258 = vcmp.eq.s32.totalorder %v242, %v30
  %vm259 = vcmp.eq.s32.totalorder %v243, %v30
  %vm260 = vcmp.eq.s32.totalorder %v244, %v30
  %vm261 = vcmp.eq.s32.totalorder %v245, %v30
  %vm262 = vcmp.eq.s32.totalorder %v246, %v30
  %vm263 = vcmp.eq.s32.totalorder %v247, %v30
  %vm264 = vcmp.eq.s32.totalorder %v248, %v30
  %vm265 = vcmp.eq.s32.totalorder %v249, %v30
  %vm266 = vcmp.eq.s32.totalorder %v250, %v30
  %vm267 = vcmp.eq.s32.totalorder %v251, %v30
  %vm268 = vcmp.eq.s32.totalorder %v252, %v30
  %v269 = vsel %vm253, 1, 0
  %v270 = vsel %vm254, 1, 0
  %v271 = vsel %vm255, 1, 0
  %v272 = vsel %vm256, 1, 0
  %v273 = vsel %vm257, 1, 0
  %v274 = vsel %vm258, 1, 0
  %v275 = vsel %vm259, 1, 0
  %v276 = vsel %vm260, 1, 0
  %v277 = vsel %vm261, 1, 0
  %v278 = vsel %vm262, 1, 0
  %v279 = vsel %vm263, 1, 0
  %v280 = vsel %vm264, 1, 0
  %v281 = vsel %vm265, 1, 0
  %v282 = vsel %vm266, 1, 0
  %v283 = vsel %vm267, 1, 0
  %v284 = vsel %vm268, 1, 0
  %v285 = vcvt.s32.f32 %v269
  %v286 = vcvt.s32.f32 %v270
  %v287 = vcvt.s32.f32 %v271
  %v288 = vcvt.s32.f32 %v272
  %v289 = vcvt.s32.f32 %v273
  %v290 = vcvt.s32.f32 %v274
  %v291 = vcvt.s32.f32 %v275
  %v292 = vcvt.s32.f32 %v276
  %v293 = vcvt.s32.f32 %v277
  %v294 = vcvt.s32.f32 %v278
  %v295 = vcvt.s32.f32 %v279
  %v296 = vcvt.s32.f32 %v280
  %v297 = vcvt.s32.f32 %v281
  %v298 = vcvt.s32.f32 %v282
  %v299 = vcvt.s32.f32 %v283
  %v300 = vcvt.s32.f32 %v284
  %v301 = vld [vmem:[%s0] sm:$0xff]
  %v302 = vld [vmem:[%s0 + $0x8] sm:$0xff]
  %v303 = vld [vmem:[%s0 + $0x10] sm:$0xff]
  %v304 = vld [vmem:[%s0 + $0x18] sm:$0xff]
  %vm305 = vcmp.lt.s32.totalorder %v28, 0
  %v306 = vsub.s32 0, %v28
  %v307 = vsel %vm305, %v306, %v28
  %v308 = vshrl.u32 %v307, 4
  %v309 = vand.u32 %v307, 15
  %v310 = vsub.s32 0, %v309
  %v311 = vsel %vm305, %v310, %v309
  %vm312 = vcmp.lt.s32.totalorder %v46, 0
  %v313 = vsub.s32 0, %v46
  %v314 = vsel %vm312, %v313, %v46
  %v315 = vshrl.u32 %v314, 4
  %v316 = vand.u32 %v314, 15
  %v317 = vsub.s32 0, %v316
  %v318 = vsel %vm312, %v317, %v316
  %vm319 = vcmp.lt.s32.totalorder %v47, 0
  %v320 = vsub.s32 0, %v47
  %v321 = vsel %vm319, %v320, %v47
  %v322 = vshrl.u32 %v321, 4
  %v323 = vand.u32 %v321, 15
  %v324 = vsub.s32 0, %v323
  %v325 = vsel %vm319, %v324, %v323
  %vm326 = vcmp.lt.s32.totalorder %v48, 0
  %v327 = vsub.s32 0, %v48
  %v328 = vsel %vm326, %v327, %v48
  %v329 = vshrl.u32 %v328, 4
  %v330 = vand.u32 %v328, 15
  %v331 = vsub.s32 0, %v330
  %v332 = vsel %vm326, %v331, %v330
  %vm333 = vcmp.ne.s32.totalorder %v311, 0
  %vm334 = vcmp.ne.s32.totalorder %v318, 0
  %vm335 = vcmp.ne.s32.totalorder %v325, 0
  %vm336 = vcmp.ne.s32.totalorder %v332, 0
  %vm337 = vcmp.lt.s32.totalorder %v311, 0
  %vm338 = vcmp.lt.s32.totalorder %v318, 0
  %vm339 = vcmp.lt.s32.totalorder %v325, 0
  %vm340 = vcmp.lt.s32.totalorder %v332, 0
  %vm341 = vmand %vm337, %vm333
  %vm342 = vmand %vm338, %vm334
  %vm343 = vmand %vm339, %vm335
  %vm344 = vmand %vm340, %vm336
  %v345 = vadd.s32 %v311, 16
  %v346 = vadd.s32 %v318, 16
  %v347 = vadd.s32 %v325, 16
  %v348 = vadd.s32 %v332, 16
  %v349 = vsel %vm341, %v345, %v311
  %v350 = vsel %vm342, %v346, %v318
  %v351 = vsel %vm343, %v347, %v325
  %v352 = vsel %vm344, %v348, %v332
  %v353 = vpack.c.bf16 %v302, %v301
  %v354 = vpack.c.bf16 %v304, %v303
  %v355 = vld [vmem:[%s1 + $0x40] sm:$0xf]
  %v356 = vld [vmem:[%s1 + $0x44] sm:$0xf]
  %v357 = vld [vmem:[%s1 + $0x48] sm:$0xf]
  %v358 = vld [vmem:[%s1 + $0x4c] sm:$0xf]
  %v359 = vld [vmem:[%s1 + $0x50] sm:$0xf]
  %v360 = vld [vmem:[%s1 + $0x54] sm:$0xf]
  %v361 = vld [vmem:[%s1 + $0x58] sm:$0xf]
  %v362 = vld [vmem:[%s1 + $0x5c] sm:$0xf]
  %v363 = vld [vmem:[%s1 + $0x60] sm:$0xf]
  %v364 = vld [vmem:[%s1 + $0x64] sm:$0xf]
  %v365 = vld [vmem:[%s1 + $0x68] sm:$0xf]
  %v366 = vld [vmem:[%s1 + $0x6c] sm:$0xf]
  %v367 = vld [vmem:[%s1 + $0x70] sm:$0xf]
  %v368 = vld [vmem:[%s1 + $0x74] sm:$0xf]
  %v369 = vld [vmem:[%s1 + $0x78] sm:$0xf]
  %v370 = vld [vmem:[%s1 + $0x7c] sm:$0xf]
  %v371 = vadd.s32 %v349, 4294967295
  %v372 = vadd.s32 %v350, 4294967295
  %v373 = vadd.s32 %v351, 4294967295
  %v374 = vadd.s32 %v352, 4294967295
  %vm375 = vcmp.ge.s32.totalorder %v371, 0
  %vm376 = vcmp.ge.s32.totalorder %v372, 0
  %vm377 = vcmp.ge.s32.totalorder %v373, 0
  %vm378 = vcmp.ge.s32.totalorder %v374, 0
  %vm379 = vcmp.lt.s32.totalorder %v371, 16
  %vm380 = vcmp.lt.s32.totalorder %v372, 16
  %vm381 = vcmp.lt.s32.totalorder %v373, 16
  %vm382 = vcmp.lt.s32.totalorder %v374, 16
  %vm383 = vmand %vm375, %vm379
  %vm384 = vmand %vm376, %vm380
  %vm385 = vmand %vm377, %vm381
  %vm386 = vmand %vm378, %vm382
  %v387 = vrot.slane %v301, 7
  %v388 = vrot.slane %v302, 7
  %v389 = vrot.slane %v303, 7
  %v390 = vrot.slane %v304, 7
  %vm391 = vcmp.lt.s32.totalorder %v28, 1
  %v392 = vsel %vm391, %v389, %v390
  %v393 = vsel %vm391, %v388, %v389
  %v394 = vsel %vm391, %v387, %v388
  %v395 = vsel %vm391, %v390, %v387
  %v396 = vsel %vm383, %v395, 0.0
  %v397 = vsel %vm384, %v394, 0.0
  %v398 = vsel %vm385, %v393, 0.0
  %v399 = vsel %vm386, %v392, 0.0
  %v400 = vpack.c.bf16 %v397, %v396
  %v401 = vpack.c.bf16 %v399, %v398
  %v402 = vld [vmem:[%s1] sm:$0xf]
  %v403 = vld [vmem:[%s1 + $0x4] sm:$0xf]
  %v404 = vld [vmem:[%s1 + $0x8] sm:$0xf]
  %v405 = vld [vmem:[%s1 + $0xc] sm:$0xf]
  %v406 = vld [vmem:[%s1 + $0x10] sm:$0xf]
  %v407 = vld [vmem:[%s1 + $0x14] sm:$0xf]
  %v408 = vld [vmem:[%s1 + $0x18] sm:$0xf]
  %v409 = vld [vmem:[%s1 + $0x1c] sm:$0xf]
  %v410 = vld [vmem:[%s1 + $0x20] sm:$0xf]
  %v411 = vld [vmem:[%s1 + $0x24] sm:$0xf]
  %v412 = vld [vmem:[%s1 + $0x28] sm:$0xf]
  %v413 = vld [vmem:[%s1 + $0x2c] sm:$0xf]
  %v414 = vld [vmem:[%s1 + $0x30] sm:$0xf]
  %v415 = vld [vmem:[%s1 + $0x34] sm:$0xf]
  %v416 = vld [vmem:[%s1 + $0x38] sm:$0xf]
  %v417 = vld [vmem:[%s1 + $0x3c] sm:$0xf]
  %v434 = vunpack.c.l.b16 %v402
  %v435 = vunpack.c.l.b16 %v403
  %v436 = vunpack.c.l.b16 %v404
  %v437 = vunpack.c.l.b16 %v405
  %v438 = vunpack.c.l.b16 %v406
  %v439 = vunpack.c.l.b16 %v407
  %v440 = vunpack.c.l.b16 %v408
  %v441 = vunpack.c.l.b16 %v409
  %v442 = vunpack.c.l.b16 %v410
  %v443 = vunpack.c.l.b16 %v411
  %v444 = vunpack.c.l.b16 %v412
  %v445 = vunpack.c.l.b16 %v413
  %v446 = vunpack.c.l.b16 %v414
  %v447 = vunpack.c.l.b16 %v415
  %v448 = vunpack.c.l.b16 %v416
  %v449 = vunpack.c.l.b16 %v417
  %v450 = vpack.c.b16 %v435, %v434
  %v451 = vpack.c.b16 %v437, %v436
  %v452 = vpack.c.b16 %v439, %v438
  %v453 = vpack.c.b16 %v441, %v440
  %v454 = vpack.c.b16 %v443, %v442
  %v455 = vpack.c.b16 %v445, %v444
  %v456 = vpack.c.b16 %v447, %v446
  %v457 = vpack.c.b16 %v449, %v448
  %466 = vmatprep.subr.bf16.mxu0 0
  %467 = vmatpush1.bf16.msra.mxu0 %v457
  %468 = vmatprep.subr.bf16.mxu0 0
  %469 = vmatpush1.bf16.msra.mxu0 %v456
  %470 = vmatprep.subr.bf16.mxu0 0
  %471 = vmatpush1.bf16.msra.mxu0 %v455
  %472 = vmatprep.subr.bf16.mxu0 0
  %473 = vmatpush1.bf16.msra.mxu0 %v454
  %474 = vmatprep.subr.bf16.mxu0 0
  %475 = vmatpush1.bf16.msra.mxu0 %v453
  %476 = vmatprep.subr.bf16.mxu0 0
  %477 = vmatpush1.bf16.msra.mxu0 %v452
  %478 = vmatprep.subr.bf16.mxu0 0
  %479 = vmatpush1.bf16.msra.mxu0 %v451
  %480 = vmatprep.subr.bf16.mxu0 0
  %481 = vmatpush1.bf16.msra.mxu0 %v450
  %482 = vmatprep.subr.bf16.mxu0 0
  %483 = vmatpush2.bf16.msra.mxu0 0
  %484 = vmatprep.subr.bf16.mxu0 0
  %485 = vmatpush2.bf16.msra.mxu0 0
  %486 = vmatprep.subr.bf16.mxu0 0
  %487 = vmatpush2.bf16.msra.mxu0 0
  %488 = vmatprep.subr.bf16.mxu0 0
  %489 = vmatpush2.bf16.msra.mxu0 0
  %490 = vmatprep.subr.bf16.mxu0 0
  %491 = vmatpush2.bf16.msra.mxu0 0
  %492 = vmatprep.subr.bf16.mxu0 0
  %493 = vmatpush2.bf16.msra.mxu0 0
  %494 = vmatprep.subr.bf16.mxu0 0
  %495 = vmatpush2.bf16.msra.mxu0 0
  %496 = vmatprep.subr.bf16.mxu0 0
  %497 = vmatpush2.bf16.msra.mxu0 0
  %498 = vmatprep.mubr.bf16.mxu0 0
  %499 = vmatmul.mubr.bf16.gmra.mxu0 %v400
  %v500 = vpop.f32.mrf.mxu0
  %v501 = vadd.f32 0.0, %v500
  %v502 = vpop.f32.mrf.mxu0
  %v503 = vpop.f32.mrf.mxu0
  %v504 = vadd.f32 0.0, %v503
  %v505 = vpop.f32.mrf.mxu0
  %506 = vmatprep.mubr.bf16.mxu0 0
  %507 = vmatmul.mubr.bf16.gmra.mxu0 %v401
  %v508 = vpop.f32.mrf.mxu0
  %v509 = vadd.f32 0.0, %v508
  %v510 = vpop.f32.mrf.mxu0
  %v511 = vpop.f32.mrf.mxu0
  %v512 = vadd.f32 0.0, %v511
  %v513 = vpop.f32.mrf.mxu0
  %514 = vdwg.mxu0
  %v531 = vunpack.c.l.b16 %v355
  %v532 = vunpack.c.l.b16 %v356
  %v533 = vunpack.c.l.b16 %v357
  %v534 = vunpack.c.l.b16 %v358
  %v535 = vunpack.c.l.b16 %v359
  %v536 = vunpack.c.l.b16 %v360
  %v537 = vunpack.c.l.b16 %v361
  %v538 = vunpack.c.l.b16 %v362
  %v539 = vunpack.c.l.b16 %v363
  %v540 = vunpack.c.l.b16 %v364
  %v541 = vunpack.c.l.b16 %v365
  %v542 = vunpack.c.l.b16 %v366
  %v543 = vunpack.c.l.b16 %v367
  %v544 = vunpack.c.l.b16 %v368
  %v545 = vunpack.c.l.b16 %v369
  %v546 = vunpack.c.l.b16 %v370
  %v547 = vpack.c.b16 %v532, %v531
  %v548 = vpack.c.b16 %v534, %v533
  %v549 = vpack.c.b16 %v536, %v535
  %v550 = vpack.c.b16 %v538, %v537
  %v551 = vpack.c.b16 %v540, %v539
  %v552 = vpack.c.b16 %v542, %v541
  %v553 = vpack.c.b16 %v544, %v543
  %v554 = vpack.c.b16 %v546, %v545
  %563 = vmatprep.subr.bf16.mxu0 0
  %564 = vmatpush1.bf16.msra.mxu0 %v554
  %565 = vmatprep.subr.bf16.mxu0 0
  %566 = vmatpush1.bf16.msra.mxu0 %v553
  %567 = vmatprep.subr.bf16.mxu0 0
  %568 = vmatpush1.bf16.msra.mxu0 %v552
  %569 = vmatprep.subr.bf16.mxu0 0
  %570 = vmatpush1.bf16.msra.mxu0 %v551
  %571 = vmatprep.subr.bf16.mxu0 0
  %572 = vmatpush1.bf16.msra.mxu0 %v550
  %573 = vmatprep.subr.bf16.mxu0 0
  %574 = vmatpush1.bf16.msra.mxu0 %v549
  %575 = vmatprep.subr.bf16.mxu0 0
  %576 = vmatpush1.bf16.msra.mxu0 %v548
  %577 = vmatprep.subr.bf16.mxu0 0
  %578 = vmatpush1.bf16.msra.mxu0 %v547
  %579 = vmatprep.subr.bf16.mxu0 0
  %580 = vmatpush2.bf16.msra.mxu0 0
  %581 = vmatprep.subr.bf16.mxu0 0
  %582 = vmatpush2.bf16.msra.mxu0 0
  %583 = vmatprep.subr.bf16.mxu0 0
  %584 = vmatpush2.bf16.msra.mxu0 0
  %585 = vmatprep.subr.bf16.mxu0 0
  %586 = vmatpush2.bf16.msra.mxu0 0
  %587 = vmatprep.subr.bf16.mxu0 0
  %588 = vmatpush2.bf16.msra.mxu0 0
  %589 = vmatprep.subr.bf16.mxu0 0
  %590 = vmatpush2.bf16.msra.mxu0 0
  %591 = vmatprep.subr.bf16.mxu0 0
  %592 = vmatpush2.bf16.msra.mxu0 0
  %593 = vmatprep.subr.bf16.mxu0 0
  %594 = vmatpush2.bf16.msra.mxu0 0
  %595 = vmatprep.mubr.bf16.mxu0 0
  %596 = vmatmul.mubr.bf16.gmra.mxu0 %v353
  %v597 = vpop.f32.mrf.mxu0
  %v598 = vadd.f32 %v501, %v597
  %v599 = vpop.f32.mrf.mxu0
  %v600 = vpop.f32.mrf.mxu0
  %v601 = vadd.f32 %v504, %v600
  %v602 = vpop.f32.mrf.mxu0
  %603 = vmatprep.mubr.bf16.mxu0 0
  %604 = vmatmul.mubr.bf16.gmra.mxu0 %v354
  %v605 = vpop.f32.mrf.mxu0
  %v606 = vadd.f32 %v509, %v605
  %v607 = vpop.f32.mrf.mxu0
  %v608 = vpop.f32.mrf.mxu0
  %v609 = vadd.f32 %v512, %v608
  %v610 = vpop.f32.mrf.mxu0
  %611 = vdwg.mxu0
  %v612 = vadd.s32 %v349, 1
  %v613 = vadd.s32 %v350, 1
  %v614 = vadd.s32 %v351, 1
  %v615 = vadd.s32 %v352, 1
  %vm616 = vcmp.ge.s32.totalorder %v612, 0
  %vm617 = vcmp.ge.s32.totalorder %v613, 0
  %vm618 = vcmp.ge.s32.totalorder %v614, 0
  %vm619 = vcmp.ge.s32.totalorder %v615, 0
  %vm620 = vcmp.lt.s32.totalorder %v612, 16
  %vm621 = vcmp.lt.s32.totalorder %v613, 16
  %vm622 = vcmp.lt.s32.totalorder %v614, 16
  %vm623 = vcmp.lt.s32.totalorder %v615, 16
  %vm624 = vmand %vm616, %vm620
  %vm625 = vmand %vm617, %vm621
  %vm626 = vmand %vm618, %vm622
  %vm627 = vmand %vm619, %vm623
  %v628 = vrot.slane %v301, 1
  %v629 = vrot.slane %v302, 1
  %v630 = vrot.slane %v303, 1
  %v631 = vrot.slane %v304, 1
  %vm632 = vcmp.lt.s32.totalorder %v28, 7
  %v633 = vsel %vm632, %v630, %v631
  %v634 = vsel %vm632, %v629, %v630
  %v635 = vsel %vm632, %v628, %v629
  %v636 = vsel %vm632, %v631, %v628
  %v637 = vsel %vm624, %v635, 0.0
  %v638 = vsel %vm625, %v634, 0.0
  %v639 = vsel %vm626, %v633, 0.0
  %v640 = vsel %vm627, %v636, 0.0
  %v641 = vpack.c.bf16 %v638, %v637
  %v642 = vpack.c.bf16 %v640, %v639
  %v643 = vld [vmem:[%s1 + $0x80] sm:$0xf]
  %v644 = vld [vmem:[%s1 + $0x84] sm:$0xf]
  %v645 = vld [vmem:[%s1 + $0x88] sm:$0xf]
  %v646 = vld [vmem:[%s1 + $0x8c] sm:$0xf]
  %v647 = vld [vmem:[%s1 + $0x90] sm:$0xf]
  %v648 = vld [vmem:[%s1 + $0x94] sm:$0xf]
  %v649 = vld [vmem:[%s1 + $0x98] sm:$0xf]
  %v650 = vld [vmem:[%s1 + $0x9c] sm:$0xf]
  %v651 = vld [vmem:[%s1 + $0xa0] sm:$0xf]
  %v652 = vld [vmem:[%s1 + $0xa4] sm:$0xf]
  %v653 = vld [vmem:[%s1 + $0xa8] sm:$0xf]
  %v654 = vld [vmem:[%s1 + $0xac] sm:$0xf]
  %v655 = vld [vmem:[%s1 + $0xb0] sm:$0xf]
  %v656 = vld [vmem:[%s1 + $0xb4] sm:$0xf]
  %v657 = vld [vmem:[%s1 + $0xb8] sm:$0xf]
  %v658 = vld [vmem:[%s1 + $0xbc] sm:$0xf]
  %v675 = vunpack.c.l.b16 %v643
  %v676 = vunpack.c.l.b16 %v644
  %v677 = vunpack.c.l.b16 %v645
  %v678 = vunpack.c.l.b16 %v646
  %v679 = vunpack.c.l.b16 %v647
  %v680 = vunpack.c.l.b16 %v648
  %v681 = vunpack.c.l.b16 %v649
  %v682 = vunpack.c.l.b16 %v650
  %v683 = vunpack.c.l.b16 %v651
  %v684 = vunpack.c.l.b16 %v652
  %v685 = vunpack.c.l.b16 %v653
  %v686 = vunpack.c.l.b16 %v654
  %v687 = vunpack.c.l.b16 %v655
  %v688 = vunpack.c.l.b16 %v656
  %v689 = vunpack.c.l.b16 %v657
  %v690 = vunpack.c.l.b16 %v658
  %v691 = vpack.c.b16 %v676, %v675
  %v692 = vpack.c.b16 %v678, %v677
  %v693 = vpack.c.b16 %v680, %v679
  %v694 = vpack.c.b16 %v682, %v681
  %v695 = vpack.c.b16 %v684, %v683
  %v696 = vpack.c.b16 %v686, %v685
  %v697 = vpack.c.b16 %v688, %v687
  %v698 = vpack.c.b16 %v690, %v689
  %707 = vmatprep.subr.bf16.mxu0 0
  %708 = vmatpush1.bf16.msra.mxu0 %v698
  %709 = vmatprep.subr.bf16.mxu0 0
  %710 = vmatpush1.bf16.msra.mxu0 %v697
  %711 = vmatprep.subr.bf16.mxu0 0
  %712 = vmatpush1.bf16.msra.mxu0 %v696
  %713 = vmatprep.subr.bf16.mxu0 0
  %714 = vmatpush1.bf16.msra.mxu0 %v695
  %715 = vmatprep.subr.bf16.mxu0 0
  %716 = vmatpush1.bf16.msra.mxu0 %v694
  %717 = vmatprep.subr.bf16.mxu0 0
  %718 = vmatpush1.bf16.msra.mxu0 %v693
  %719 = vmatprep.subr.bf16.mxu0 0
  %720 = vmatpush1.bf16.msra.mxu0 %v692
  %721 = vmatprep.subr.bf16.mxu0 0
  %722 = vmatpush1.bf16.msra.mxu0 %v691
  %723 = vmatprep.subr.bf16.mxu0 0
  %724 = vmatpush2.bf16.msra.mxu0 0
  %725 = vmatprep.subr.bf16.mxu0 0
  %726 = vmatpush2.bf16.msra.mxu0 0
  %727 = vmatprep.subr.bf16.mxu0 0
  %728 = vmatpush2.bf16.msra.mxu0 0
  %729 = vmatprep.subr.bf16.mxu0 0
  %730 = vmatpush2.bf16.msra.mxu0 0
  %731 = vmatprep.subr.bf16.mxu0 0
  %732 = vmatpush2.bf16.msra.mxu0 0
  %733 = vmatprep.subr.bf16.mxu0 0
  %734 = vmatpush2.bf16.msra.mxu0 0
  %735 = vmatprep.subr.bf16.mxu0 0
  %736 = vmatpush2.bf16.msra.mxu0 0
  %737 = vmatprep.subr.bf16.mxu0 0
  %738 = vmatpush2.bf16.msra.mxu0 0
  %739 = vmatprep.mubr.bf16.mxu0 0
  %740 = vmatmul.mubr.bf16.gmra.mxu0 %v641
  %v741 = vpop.f32.mrf.mxu0
  %v742 = vadd.f32 0.0, %v741
  %v743 = vpop.f32.mrf.mxu0
  %v744 = vpop.f32.mrf.mxu0
  %v745 = vadd.f32 0.0, %v744
  %v746 = vpop.f32.mrf.mxu0
  %747 = vmatprep.mubr.bf16.mxu0 0
  %748 = vmatmul.mubr.bf16.gmra.mxu0 %v642
  %v749 = vpop.f32.mrf.mxu0
  %v750 = vadd.f32 0.0, %v749
  %v751 = vpop.f32.mrf.mxu0
  %v752 = vpop.f32.mrf.mxu0
  %v753 = vadd.f32 0.0, %v752
  %v754 = vpop.f32.mrf.mxu0
  %755 = vdwg.mxu0
  %v756 = vadd.f32 %v598, %v742
  %v757 = vadd.f32 %v601, %v745
  %v758 = vadd.f32 %v606, %v750
  %v759 = vadd.f32 %v609, %v753
  %v760 = vld [vmem:[%s3] sm:$0x1]
  %v761 = vld [vmem:[%s4] sm:$0x1]
  %v762 = vadd.f32 %v756, %v757
  %v763 = vadd.f32 %v762, %v758
  %v764 = vadd.f32 %v763, %v759
  %v765 = vrot.slane %v764, 4
  %v766 = vadd.f32 %v764, %v765
  %v767 = vrot.slane %v766, 2
  %v768 = vadd.f32 %v766, %v767
  %v769 = vrot.slane %v768, 1
  %v770 = vadd.f32 %v768, %v769
  %v771 = vmul.f32 %v756, %v756
  %v772 = vmul.f32 %v757, %v757
  %v773 = vmul.f32 %v758, %v758
  %v774 = vmul.f32 %v759, %v759
  %v775 = vadd.f32 %v771, %v772
  %v776 = vadd.f32 %v775, %v773
  %v777 = vadd.f32 %v776, %v774
  %v778 = vrot.slane %v777, 4
  %v779 = vadd.f32 %v777, %v778
  %v780 = vrot.slane %v779, 2
  %v781 = vadd.f32 %v779, %v780
  %v782 = vrot.slane %v781, 1
  %v783 = vadd.f32 %v781, %v782
  %784 = vmatprep.subr.mxu0 0.0
  %785 = vmatpush1.msra.mxu0 %v300
  %786 = vmatprep.subr.mxu0 0.0
  %787 = vmatpush1.msra.mxu0 %v299
  %788 = vmatprep.subr.mxu0 0.0
  %789 = vmatpush1.msra.mxu0 %v298
  %790 = vmatprep.subr.mxu0 0.0
  %791 = vmatpush1.msra.mxu0 %v297
  %792 = vmatprep.subr.mxu0 0.0
  %793 = vmatpush1.msra.mxu0 %v296
  %794 = vmatprep.subr.mxu0 0.0
  %795 = vmatpush1.msra.mxu0 %v295
  %796 = vmatprep.subr.mxu0 0.0
  %797 = vmatpush1.msra.mxu0 %v294
  %798 = vmatprep.subr.mxu0 0.0
  %799 = vmatpush1.msra.mxu0 %v293
  %800 = vmatprep.subr.mxu0 0.0
  %801 = vmatpush1.msra.mxu0 %v292
  %802 = vmatprep.subr.mxu0 0.0
  %803 = vmatpush1.msra.mxu0 %v291
  %804 = vmatprep.subr.mxu0 0.0
  %805 = vmatpush1.msra.mxu0 %v290
  %806 = vmatprep.subr.mxu0 0.0
  %807 = vmatpush1.msra.mxu0 %v289
  %808 = vmatprep.subr.mxu0 0.0
  %809 = vmatpush1.msra.mxu0 %v288
  %810 = vmatprep.subr.mxu0 0.0
  %811 = vmatpush1.msra.mxu0 %v287
  %812 = vmatprep.subr.mxu0 0.0
  %813 = vmatpush1.msra.mxu0 %v286
  %814 = vmatprep.subr.mxu0 0.0
  %815 = vmatpush1.msra.mxu0 %v285
  %816 = vmatprep.subr.mxu0 0.0
  %817 = vmatpush2.msra.mxu0 0.0
  %818 = vmatprep.subr.mxu0 0.0
  %819 = vmatpush2.msra.mxu0 0.0
  %820 = vmatprep.subr.mxu0 0.0
  %821 = vmatpush2.msra.mxu0 0.0
  %822 = vmatprep.subr.mxu0 0.0
  %823 = vmatpush2.msra.mxu0 0.0
  %824 = vmatprep.subr.mxu0 0.0
  %825 = vmatpush2.msra.mxu0 0.0
  %826 = vmatprep.subr.mxu0 0.0
  %827 = vmatpush2.msra.mxu0 0.0
  %828 = vmatprep.subr.mxu0 0.0
  %829 = vmatpush2.msra.mxu0 0.0
  %830 = vmatprep.subr.mxu0 0.0
  %831 = vmatpush2.msra.mxu0 0.0
  %832 = vmatprep.subr.mxu0 0.0
  %833 = vmatpush2.msra.mxu0 0.0
  %834 = vmatprep.subr.mxu0 0.0
  %835 = vmatpush2.msra.mxu0 0.0
  %836 = vmatprep.subr.mxu0 0.0
  %837 = vmatpush2.msra.mxu0 0.0
  %838 = vmatprep.subr.mxu0 0.0
  %839 = vmatpush2.msra.mxu0 0.0
  %840 = vmatprep.subr.mxu0 0.0
  %841 = vmatpush2.msra.mxu0 0.0
  %842 = vmatprep.subr.mxu0 0.0
  %843 = vmatpush2.msra.mxu0 0.0
  %844 = vmatprep.subr.mxu0 0.0
  %845 = vmatpush2.msra.mxu0 0.0
  %846 = vmatprep.subr.mxu0 0.0
  %847 = vmatpush2.msra.mxu0 0.0
  %848 = vmatprep.mubr.f32.mxu0 0.0
  %849 = vmatmul.mubr.f32.gmra.mxu0 %v770
  %v850 = vpop.f32.mrf.mxu0
  %v851 = vadd.f32 0.0, %v850
  %v852 = vpop.f32.mrf.mxu0
  %853 = vdwg.mxu0
  %v854 = vmul.f32 %v851, 0.001953125
  %855 = vmatprep.subr.mxu0 0.0
  %856 = vmatpush1.msra.mxu0 %v300
  %857 = vmatprep.subr.mxu0 0.0
  %858 = vmatpush1.msra.mxu0 %v299
  %859 = vmatprep.subr.mxu0 0.0
  %860 = vmatpush1.msra.mxu0 %v298
  %861 = vmatprep.subr.mxu0 0.0
  %862 = vmatpush1.msra.mxu0 %v297
  %863 = vmatprep.subr.mxu0 0.0
  %864 = vmatpush1.msra.mxu0 %v296
  %865 = vmatprep.subr.mxu0 0.0
  %866 = vmatpush1.msra.mxu0 %v295
  %867 = vmatprep.subr.mxu0 0.0
  %868 = vmatpush1.msra.mxu0 %v294
  %869 = vmatprep.subr.mxu0 0.0
  %870 = vmatpush1.msra.mxu0 %v293
  %871 = vmatprep.subr.mxu0 0.0
  %872 = vmatpush1.msra.mxu0 %v292
  %873 = vmatprep.subr.mxu0 0.0
  %874 = vmatpush1.msra.mxu0 %v291
  %875 = vmatprep.subr.mxu0 0.0
  %876 = vmatpush1.msra.mxu0 %v290
  %877 = vmatprep.subr.mxu0 0.0
  %878 = vmatpush1.msra.mxu0 %v289
  %879 = vmatprep.subr.mxu0 0.0
  %880 = vmatpush1.msra.mxu0 %v288
  %881 = vmatprep.subr.mxu0 0.0
  %882 = vmatpush1.msra.mxu0 %v287
  %883 = vmatprep.subr.mxu0 0.0
  %884 = vmatpush1.msra.mxu0 %v286
  %885 = vmatprep.subr.mxu0 0.0
  %886 = vmatpush1.msra.mxu0 %v285
  %887 = vmatprep.subr.mxu0 0.0
  %888 = vmatpush2.msra.mxu0 0.0
  %889 = vmatprep.subr.mxu0 0.0
  %890 = vmatpush2.msra.mxu0 0.0
  %891 = vmatprep.subr.mxu0 0.0
  %892 = vmatpush2.msra.mxu0 0.0
  %893 = vmatprep.subr.mxu0 0.0
  %894 = vmatpush2.msra.mxu0 0.0
  %895 = vmatprep.subr.mxu0 0.0
  %896 = vmatpush2.msra.mxu0 0.0
  %897 = vmatprep.subr.mxu0 0.0
  %898 = vmatpush2.msra.mxu0 0.0
  %899 = vmatprep.subr.mxu0 0.0
  %900 = vmatpush2.msra.mxu0 0.0
  %901 = vmatprep.subr.mxu0 0.0
  %902 = vmatpush2.msra.mxu0 0.0
  %903 = vmatprep.subr.mxu0 0.0
  %904 = vmatpush2.msra.mxu0 0.0
  %905 = vmatprep.subr.mxu0 0.0
  %906 = vmatpush2.msra.mxu0 0.0
  %907 = vmatprep.subr.mxu0 0.0
  %908 = vmatpush2.msra.mxu0 0.0
  %909 = vmatprep.subr.mxu0 0.0
  %910 = vmatpush2.msra.mxu0 0.0
  %911 = vmatprep.subr.mxu0 0.0
  %912 = vmatpush2.msra.mxu0 0.0
  %913 = vmatprep.subr.mxu0 0.0
  %914 = vmatpush2.msra.mxu0 0.0
  %915 = vmatprep.subr.mxu0 0.0
  %916 = vmatpush2.msra.mxu0 0.0
  %917 = vmatprep.subr.mxu0 0.0
  %918 = vmatpush2.msra.mxu0 0.0
  %919 = vmatprep.mubr.f32.mxu0 0.0
  %920 = vmatmul.mubr.f32.gmra.mxu0 %v783
  %v921 = vpop.f32.mrf.mxu0
  %v922 = vadd.f32 0.0, %v921
  %v923 = vpop.f32.mrf.mxu0
  %924 = vdwg.mxu0
  %v925 = vmul.f32 %v922, 0.001953125
  %v926 = vmul.f32 %v854, %v854
  %v927 = vsub.f32 %v925, %v926
  %v928 = vadd.f32 %v927, 1e-05
  %v929 = vrsqrt.pop %v928
  %v930 = vmul.f32 %v929, %v760
  %v931 = vmul.f32 %v854, %v930
  %v932 = vsub.f32 %v761, %v931
  %vm933 = vcmask 64512
  %v935 = vsel %vm933, %v930, 0
  %937 = vmatprep.subr.mxu0 0.0
  %938 = vmatpush1.msra.mxu0 0.0
  %939 = vmatprep.subr.mxu0 0.0
  %940 = vmatpush1.msra.mxu0 0.0
  %941 = vmatprep.subr.mxu0 0.0
  %942 = vmatpush1.msra.mxu0 0.0
  %943 = vmatprep.subr.mxu0 0.0
  %944 = vmatpush1.msra.mxu0 0.0
  %945 = vmatprep.subr.mxu0 0.0
  %946 = vmatpush1.msra.mxu0 0.0
  %947 = vmatprep.subr.mxu0 0.0
  %948 = vmatpush1.msra.mxu0 0.0
  %949 = vmatprep.subr.mxu0 0.0
  %950 = vmatpush1.msra.mxu0 0.0
  %951 = vmatprep.subr.mxu0 0.0
  %952 = vmatpush1.msra.mxu0 0.0
  %953 = vmatprep.subr.mxu0 0.0
  %954 = vmatpush1.msra.mxu0 0.0
  %955 = vmatprep.subr.mxu0 0.0
  %956 = vmatpush1.msra.mxu0 0.0
  %957 = vmatprep.subr.mxu0 0.0
  %958 = vmatpush1.msra.mxu0 0.0
  %959 = vmatprep.subr.mxu0 0.0
  %960 = vmatpush1.msra.mxu0 0.0
  %961 = vmatprep.subr.mxu0 0.0
  %962 = vmatpush1.msra.mxu0 0.0
  %963 = vmatprep.subr.mxu0 0.0
  %964 = vmatpush1.msra.mxu0 0.0
  %965 = vmatprep.subr.mxu0 0.0
  %966 = vmatpush1.msra.mxu0 0.0
  %967 = vmatprep.subr.mxu0 0.0
  %968 = vmatpush1.msra.mxu0 %v45
  %969 = vmatprep.subr.mxu0 0.0
  %970 = vmatpush2.msra.mxu0 0.0
  %971 = vmatprep.subr.mxu0 0.0
  %972 = vmatpush2.msra.mxu0 0.0
  %973 = vmatprep.subr.mxu0 0.0
  %974 = vmatpush2.msra.mxu0 0.0
  %975 = vmatprep.subr.mxu0 0.0
  %976 = vmatpush2.msra.mxu0 0.0
  %977 = vmatprep.subr.mxu0 0.0
  %978 = vmatpush2.msra.mxu0 0.0
  %979 = vmatprep.subr.mxu0 0.0
  %980 = vmatpush2.msra.mxu0 0.0
  %981 = vmatprep.subr.mxu0 0.0
  %982 = vmatpush2.msra.mxu0 0.0
  %983 = vmatprep.subr.mxu0 0.0
  %984 = vmatpush2.msra.mxu0 0.0
  %985 = vmatprep.subr.mxu0 0.0
  %986 = vmatpush2.msra.mxu0 0.0
  %987 = vmatprep.subr.mxu0 0.0
  %988 = vmatpush2.msra.mxu0 0.0
  %989 = vmatprep.subr.mxu0 0.0
  %990 = vmatpush2.msra.mxu0 0.0
  %991 = vmatprep.subr.mxu0 0.0
  %992 = vmatpush2.msra.mxu0 0.0
  %993 = vmatprep.subr.mxu0 0.0
  %994 = vmatpush2.msra.mxu0 0.0
  %995 = vmatprep.subr.mxu0 0.0
  %996 = vmatpush2.msra.mxu0 0.0
  %997 = vmatprep.subr.mxu0 0.0
  %998 = vmatpush2.msra.mxu0 0.0
  %999 = vmatprep.subr.mxu0 0.0
  %1000 = vmatpush2.msra.mxu0 0.0
  %1001 = vmatprep.mubr.f32.mxu0 0.0
  %1002 = vmatmul.mubr.f32.gmra.mxu0 %v935
  %v1003 = vpop.f32.mrf.mxu0
  %v1004 = vadd.f32 0.0, %v1003
  %v1005 = vpop.f32.mrf.mxu0
  %1006 = vdwg.mxu0
  %v1008 = vsel %vm933, %v932, 0
  %1010 = vmatprep.subr.mxu0 0.0
  %1011 = vmatpush1.msra.mxu0 0.0
  %1012 = vmatprep.subr.mxu0 0.0
  %1013 = vmatpush1.msra.mxu0 0.0
  %1014 = vmatprep.subr.mxu0 0.0
  %1015 = vmatpush1.msra.mxu0 0.0
  %1016 = vmatprep.subr.mxu0 0.0
  %1017 = vmatpush1.msra.mxu0 0.0
  %1018 = vmatprep.subr.mxu0 0.0
  %1019 = vmatpush1.msra.mxu0 0.0
  %1020 = vmatprep.subr.mxu0 0.0
  %1021 = vmatpush1.msra.mxu0 0.0
  %1022 = vmatprep.subr.mxu0 0.0
  %1023 = vmatpush1.msra.mxu0 0.0
  %1024 = vmatprep.subr.mxu0 0.0
  %1025 = vmatpush1.msra.mxu0 0.0
  %1026 = vmatprep.subr.mxu0 0.0
  %1027 = vmatpush1.msra.mxu0 0.0
  %1028 = vmatprep.subr.mxu0 0.0
  %1029 = vmatpush1.msra.mxu0 0.0
  %1030 = vmatprep.subr.mxu0 0.0
  %1031 = vmatpush1.msra.mxu0 0.0
  %1032 = vmatprep.subr.mxu0 0.0
  %1033 = vmatpush1.msra.mxu0 0.0
  %1034 = vmatprep.subr.mxu0 0.0
  %1035 = vmatpush1.msra.mxu0 0.0
  %1036 = vmatprep.subr.mxu0 0.0
  %1037 = vmatpush1.msra.mxu0 0.0
  %1038 = vmatprep.subr.mxu0 0.0
  %1039 = vmatpush1.msra.mxu0 0.0
  %1040 = vmatprep.subr.mxu0 0.0
  %1041 = vmatpush1.msra.mxu0 %v45
  %1042 = vmatprep.subr.mxu0 0.0
  %1043 = vmatpush2.msra.mxu0 0.0
  %1044 = vmatprep.subr.mxu0 0.0
  %1045 = vmatpush2.msra.mxu0 0.0
  %1046 = vmatprep.subr.mxu0 0.0
  %1047 = vmatpush2.msra.mxu0 0.0
  %1048 = vmatprep.subr.mxu0 0.0
  %1049 = vmatpush2.msra.mxu0 0.0
  %1050 = vmatprep.subr.mxu0 0.0
  %1051 = vmatpush2.msra.mxu0 0.0
  %1052 = vmatprep.subr.mxu0 0.0
  %1053 = vmatpush2.msra.mxu0 0.0
  %1054 = vmatprep.subr.mxu0 0.0
  %1055 = vmatpush2.msra.mxu0 0.0
  %1056 = vmatprep.subr.mxu0 0.0
  %1057 = vmatpush2.msra.mxu0 0.0
  %1058 = vmatprep.subr.mxu0 0.0
  %1059 = vmatpush2.msra.mxu0 0.0
  %1060 = vmatprep.subr.mxu0 0.0
  %1061 = vmatpush2.msra.mxu0 0.0
  %1062 = vmatprep.subr.mxu0 0.0
  %1063 = vmatpush2.msra.mxu0 0.0
  %1064 = vmatprep.subr.mxu0 0.0
  %1065 = vmatpush2.msra.mxu0 0.0
  %1066 = vmatprep.subr.mxu0 0.0
  %1067 = vmatpush2.msra.mxu0 0.0
  %1068 = vmatprep.subr.mxu0 0.0
  %1069 = vmatpush2.msra.mxu0 0.0
  %1070 = vmatprep.subr.mxu0 0.0
  %1071 = vmatpush2.msra.mxu0 0.0
  %1072 = vmatprep.subr.mxu0 0.0
  %1073 = vmatpush2.msra.mxu0 0.0
  %1074 = vmatprep.mubr.f32.mxu0 0.0
  %1075 = vmatmul.mubr.f32.gmra.mxu0 %v1008
  %v1076 = vpop.f32.mrf.mxu0
  %v1077 = vadd.f32 0.0, %v1076
  %v1078 = vpop.f32.mrf.mxu0
  %1079 = vdwg.mxu0
  %v1080 = vlaneseq
  %v1081 = vshrl.u32 %v1080, 7
  %v1082 = vsub.s32 0, %v1081
  %v1083 = vrot.slane %v1004, %v1082
  %v1084 = vmul.f32 %v756, %v1083
  %v1085 = vmul.f32 %v757, %v1083
  %v1086 = vmul.f32 %v758, %v1083
  %v1087 = vmul.f32 %v759, %v1083
  %v1088 = vlaneseq
  %v1089 = vshrl.u32 %v1088, 7
  %v1090 = vsub.s32 0, %v1089
  %v1091 = vrot.slane %v1077, %v1090
  %v1092 = vadd.f32 %v1084, %v1091
  %v1093 = vadd.f32 %v1085, %v1091
  %v1094 = vadd.f32 %v1086, %v1091
  %v1095 = vadd.f32 %v1087, %v1091
  %v1096 = vmax.f32 %v1092, 0.0
  %v1097 = vmax.f32 %v1093, 0.0
  %v1098 = vmax.f32 %v1094, 0.0
  %v1099 = vmax.f32 %v1095, 0.0
  %v1100 = vpack.c.bf16 %v1097, %v1096
  %v1101 = vpack.c.bf16 %v1099, %v1098
  %v1102 = vld [vmem:[%s2 + $0x40] sm:$0xf]
  %v1103 = vld [vmem:[%s2 + $0x44] sm:$0xf]
  %v1104 = vld [vmem:[%s2 + $0x48] sm:$0xf]
  %v1105 = vld [vmem:[%s2 + $0x4c] sm:$0xf]
  %v1106 = vld [vmem:[%s2 + $0x50] sm:$0xf]
  %v1107 = vld [vmem:[%s2 + $0x54] sm:$0xf]
  %v1108 = vld [vmem:[%s2 + $0x58] sm:$0xf]
  %v1109 = vld [vmem:[%s2 + $0x5c] sm:$0xf]
  %v1110 = vld [vmem:[%s2 + $0x60] sm:$0xf]
  %v1111 = vld [vmem:[%s2 + $0x64] sm:$0xf]
  %v1112 = vld [vmem:[%s2 + $0x68] sm:$0xf]
  %v1113 = vld [vmem:[%s2 + $0x6c] sm:$0xf]
  %v1114 = vld [vmem:[%s2 + $0x70] sm:$0xf]
  %v1115 = vld [vmem:[%s2 + $0x74] sm:$0xf]
  %v1116 = vld [vmem:[%s2 + $0x78] sm:$0xf]
  %v1117 = vld [vmem:[%s2 + $0x7c] sm:$0xf]
  %v1118 = vrot.slane %v1096, 7
  %v1119 = vrot.slane %v1097, 7
  %v1120 = vrot.slane %v1098, 7
  %v1121 = vrot.slane %v1099, 7
  %v1122 = vsel %vm391, %v1120, %v1121
  %v1123 = vsel %vm391, %v1119, %v1120
  %v1124 = vsel %vm391, %v1118, %v1119
  %v1125 = vsel %vm391, %v1121, %v1118
  %v1126 = vsel %vm383, %v1125, 0.0
  %v1127 = vsel %vm384, %v1124, 0.0
  %v1128 = vsel %vm385, %v1123, 0.0
  %v1129 = vsel %vm386, %v1122, 0.0
  %v1130 = vpack.c.bf16 %v1127, %v1126
  %v1131 = vpack.c.bf16 %v1129, %v1128
  %v1132 = vld [vmem:[%s2] sm:$0xf]
  %v1133 = vld [vmem:[%s2 + $0x4] sm:$0xf]
  %v1134 = vld [vmem:[%s2 + $0x8] sm:$0xf]
  %v1135 = vld [vmem:[%s2 + $0xc] sm:$0xf]
  %v1136 = vld [vmem:[%s2 + $0x10] sm:$0xf]
  %v1137 = vld [vmem:[%s2 + $0x14] sm:$0xf]
  %v1138 = vld [vmem:[%s2 + $0x18] sm:$0xf]
  %v1139 = vld [vmem:[%s2 + $0x1c] sm:$0xf]
  %v1140 = vld [vmem:[%s2 + $0x20] sm:$0xf]
  %v1141 = vld [vmem:[%s2 + $0x24] sm:$0xf]
  %v1142 = vld [vmem:[%s2 + $0x28] sm:$0xf]
  %v1143 = vld [vmem:[%s2 + $0x2c] sm:$0xf]
  %v1144 = vld [vmem:[%s2 + $0x30] sm:$0xf]
  %v1145 = vld [vmem:[%s2 + $0x34] sm:$0xf]
  %v1146 = vld [vmem:[%s2 + $0x38] sm:$0xf]
  %v1147 = vld [vmem:[%s2 + $0x3c] sm:$0xf]
  %v1164 = vunpack.c.l.b16 %v1132
  %v1165 = vunpack.c.l.b16 %v1133
  %v1166 = vunpack.c.l.b16 %v1134
  %v1167 = vunpack.c.l.b16 %v1135
  %v1168 = vunpack.c.l.b16 %v1136
  %v1169 = vunpack.c.l.b16 %v1137
  %v1170 = vunpack.c.l.b16 %v1138
  %v1171 = vunpack.c.l.b16 %v1139
  %v1172 = vunpack.c.l.b16 %v1140
  %v1173 = vunpack.c.l.b16 %v1141
  %v1174 = vunpack.c.l.b16 %v1142
  %v1175 = vunpack.c.l.b16 %v1143
  %v1176 = vunpack.c.l.b16 %v1144
  %v1177 = vunpack.c.l.b16 %v1145
  %v1178 = vunpack.c.l.b16 %v1146
  %v1179 = vunpack.c.l.b16 %v1147
  %v1180 = vpack.c.b16 %v1165, %v1164
  %v1181 = vpack.c.b16 %v1167, %v1166
  %v1182 = vpack.c.b16 %v1169, %v1168
  %v1183 = vpack.c.b16 %v1171, %v1170
  %v1184 = vpack.c.b16 %v1173, %v1172
  %v1185 = vpack.c.b16 %v1175, %v1174
  %v1186 = vpack.c.b16 %v1177, %v1176
  %v1187 = vpack.c.b16 %v1179, %v1178
  %1196 = vmatprep.subr.bf16.mxu0 0
  %1197 = vmatpush1.bf16.msra.mxu0 %v1187
  %1198 = vmatprep.subr.bf16.mxu0 0
  %1199 = vmatpush1.bf16.msra.mxu0 %v1186
  %1200 = vmatprep.subr.bf16.mxu0 0
  %1201 = vmatpush1.bf16.msra.mxu0 %v1185
  %1202 = vmatprep.subr.bf16.mxu0 0
  %1203 = vmatpush1.bf16.msra.mxu0 %v1184
  %1204 = vmatprep.subr.bf16.mxu0 0
  %1205 = vmatpush1.bf16.msra.mxu0 %v1183
  %1206 = vmatprep.subr.bf16.mxu0 0
  %1207 = vmatpush1.bf16.msra.mxu0 %v1182
  %1208 = vmatprep.subr.bf16.mxu0 0
  %1209 = vmatpush1.bf16.msra.mxu0 %v1181
  %1210 = vmatprep.subr.bf16.mxu0 0
  %1211 = vmatpush1.bf16.msra.mxu0 %v1180
  %1212 = vmatprep.subr.bf16.mxu0 0
  %1213 = vmatpush2.bf16.msra.mxu0 0
  %1214 = vmatprep.subr.bf16.mxu0 0
  %1215 = vmatpush2.bf16.msra.mxu0 0
  %1216 = vmatprep.subr.bf16.mxu0 0
  %1217 = vmatpush2.bf16.msra.mxu0 0
  %1218 = vmatprep.subr.bf16.mxu0 0
  %1219 = vmatpush2.bf16.msra.mxu0 0
  %1220 = vmatprep.subr.bf16.mxu0 0
  %1221 = vmatpush2.bf16.msra.mxu0 0
  %1222 = vmatprep.subr.bf16.mxu0 0
  %1223 = vmatpush2.bf16.msra.mxu0 0
  %1224 = vmatprep.subr.bf16.mxu0 0
  %1225 = vmatpush2.bf16.msra.mxu0 0
  %1226 = vmatprep.subr.bf16.mxu0 0
  %1227 = vmatpush2.bf16.msra.mxu0 0
  %1228 = vmatprep.mubr.bf16.mxu0 0
  %1229 = vmatmul.mubr.bf16.gmra.mxu0 %v1130
  %v1230 = vpop.f32.mrf.mxu0
  %v1231 = vadd.f32 0.0, %v1230
  %v1232 = vpop.f32.mrf.mxu0
  %v1233 = vpop.f32.mrf.mxu0
  %v1234 = vadd.f32 0.0, %v1233
  %v1235 = vpop.f32.mrf.mxu0
  %1236 = vmatprep.mubr.bf16.mxu0 0
  %1237 = vmatmul.mubr.bf16.gmra.mxu0 %v1131
  %v1238 = vpop.f32.mrf.mxu0
  %v1239 = vadd.f32 0.0, %v1238
  %v1240 = vpop.f32.mrf.mxu0
  %v1241 = vpop.f32.mrf.mxu0
  %v1242 = vadd.f32 0.0, %v1241
  %v1243 = vpop.f32.mrf.mxu0
  %1244 = vdwg.mxu0
  %v1261 = vunpack.c.l.b16 %v1102
  %v1262 = vunpack.c.l.b16 %v1103
  %v1263 = vunpack.c.l.b16 %v1104
  %v1264 = vunpack.c.l.b16 %v1105
  %v1265 = vunpack.c.l.b16 %v1106
  %v1266 = vunpack.c.l.b16 %v1107
  %v1267 = vunpack.c.l.b16 %v1108
  %v1268 = vunpack.c.l.b16 %v1109
  %v1269 = vunpack.c.l.b16 %v1110
  %v1270 = vunpack.c.l.b16 %v1111
  %v1271 = vunpack.c.l.b16 %v1112
  %v1272 = vunpack.c.l.b16 %v1113
  %v1273 = vunpack.c.l.b16 %v1114
  %v1274 = vunpack.c.l.b16 %v1115
  %v1275 = vunpack.c.l.b16 %v1116
  %v1276 = vunpack.c.l.b16 %v1117
  %v1277 = vpack.c.b16 %v1262, %v1261
  %v1278 = vpack.c.b16 %v1264, %v1263
  %v1279 = vpack.c.b16 %v1266, %v1265
  %v1280 = vpack.c.b16 %v1268, %v1267
  %v1281 = vpack.c.b16 %v1270, %v1269
  %v1282 = vpack.c.b16 %v1272, %v1271
  %v1283 = vpack.c.b16 %v1274, %v1273
  %v1284 = vpack.c.b16 %v1276, %v1275
  %1293 = vmatprep.subr.bf16.mxu0 0
  %1294 = vmatpush1.bf16.msra.mxu0 %v1284
  %1295 = vmatprep.subr.bf16.mxu0 0
  %1296 = vmatpush1.bf16.msra.mxu0 %v1283
  %1297 = vmatprep.subr.bf16.mxu0 0
  %1298 = vmatpush1.bf16.msra.mxu0 %v1282
  %1299 = vmatprep.subr.bf16.mxu0 0
  %1300 = vmatpush1.bf16.msra.mxu0 %v1281
  %1301 = vmatprep.subr.bf16.mxu0 0
  %1302 = vmatpush1.bf16.msra.mxu0 %v1280
  %1303 = vmatprep.subr.bf16.mxu0 0
  %1304 = vmatpush1.bf16.msra.mxu0 %v1279
  %1305 = vmatprep.subr.bf16.mxu0 0
  %1306 = vmatpush1.bf16.msra.mxu0 %v1278
  %1307 = vmatprep.subr.bf16.mxu0 0
  %1308 = vmatpush1.bf16.msra.mxu0 %v1277
  %1309 = vmatprep.subr.bf16.mxu0 0
  %1310 = vmatpush2.bf16.msra.mxu0 0
  %1311 = vmatprep.subr.bf16.mxu0 0
  %1312 = vmatpush2.bf16.msra.mxu0 0
  %1313 = vmatprep.subr.bf16.mxu0 0
  %1314 = vmatpush2.bf16.msra.mxu0 0
  %1315 = vmatprep.subr.bf16.mxu0 0
  %1316 = vmatpush2.bf16.msra.mxu0 0
  %1317 = vmatprep.subr.bf16.mxu0 0
  %1318 = vmatpush2.bf16.msra.mxu0 0
  %1319 = vmatprep.subr.bf16.mxu0 0
  %1320 = vmatpush2.bf16.msra.mxu0 0
  %1321 = vmatprep.subr.bf16.mxu0 0
  %1322 = vmatpush2.bf16.msra.mxu0 0
  %1323 = vmatprep.subr.bf16.mxu0 0
  %1324 = vmatpush2.bf16.msra.mxu0 0
  %1325 = vmatprep.mubr.bf16.mxu0 0
  %1326 = vmatmul.mubr.bf16.gmra.mxu0 %v1100
  %v1327 = vpop.f32.mrf.mxu0
  %v1328 = vadd.f32 %v1231, %v1327
  %v1329 = vpop.f32.mrf.mxu0
  %v1330 = vpop.f32.mrf.mxu0
  %v1331 = vadd.f32 %v1234, %v1330
  %v1332 = vpop.f32.mrf.mxu0
  %1333 = vmatprep.mubr.bf16.mxu0 0
  %1334 = vmatmul.mubr.bf16.gmra.mxu0 %v1101
  %v1335 = vpop.f32.mrf.mxu0
  %v1336 = vadd.f32 %v1239, %v1335
  %v1337 = vpop.f32.mrf.mxu0
  %v1338 = vpop.f32.mrf.mxu0
  %v1339 = vadd.f32 %v1242, %v1338
  %v1340 = vpop.f32.mrf.mxu0
  %1341 = vdwg.mxu0
  %v1342 = vrot.slane %v1096, 1
  %v1343 = vrot.slane %v1097, 1
  %v1344 = vrot.slane %v1098, 1
  %v1345 = vrot.slane %v1099, 1
  %v1346 = vsel %vm632, %v1344, %v1345
  %v1347 = vsel %vm632, %v1343, %v1344
  %v1348 = vsel %vm632, %v1342, %v1343
  %v1349 = vsel %vm632, %v1345, %v1342
  %v1350 = vsel %vm624, %v1348, 0.0
  %v1351 = vsel %vm625, %v1347, 0.0
  %v1352 = vsel %vm626, %v1346, 0.0
  %v1353 = vsel %vm627, %v1349, 0.0
  %v1354 = vpack.c.bf16 %v1351, %v1350
  %v1355 = vpack.c.bf16 %v1353, %v1352
  %v1356 = vld [vmem:[%s2 + $0x80] sm:$0xf]
  %v1357 = vld [vmem:[%s2 + $0x84] sm:$0xf]
  %v1358 = vld [vmem:[%s2 + $0x88] sm:$0xf]
  %v1359 = vld [vmem:[%s2 + $0x8c] sm:$0xf]
  %v1360 = vld [vmem:[%s2 + $0x90] sm:$0xf]
  %v1361 = vld [vmem:[%s2 + $0x94] sm:$0xf]
  %v1362 = vld [vmem:[%s2 + $0x98] sm:$0xf]
  %v1363 = vld [vmem:[%s2 + $0x9c] sm:$0xf]
  %v1364 = vld [vmem:[%s2 + $0xa0] sm:$0xf]
  %v1365 = vld [vmem:[%s2 + $0xa4] sm:$0xf]
  %v1366 = vld [vmem:[%s2 + $0xa8] sm:$0xf]
  %v1367 = vld [vmem:[%s2 + $0xac] sm:$0xf]
  %v1368 = vld [vmem:[%s2 + $0xb0] sm:$0xf]
  %v1369 = vld [vmem:[%s2 + $0xb4] sm:$0xf]
  %v1370 = vld [vmem:[%s2 + $0xb8] sm:$0xf]
  %v1371 = vld [vmem:[%s2 + $0xbc] sm:$0xf]
  %v1388 = vunpack.c.l.b16 %v1356
  %v1389 = vunpack.c.l.b16 %v1357
  %v1390 = vunpack.c.l.b16 %v1358
  %v1391 = vunpack.c.l.b16 %v1359
  %v1392 = vunpack.c.l.b16 %v1360
  %v1393 = vunpack.c.l.b16 %v1361
  %v1394 = vunpack.c.l.b16 %v1362
  %v1395 = vunpack.c.l.b16 %v1363
  %v1396 = vunpack.c.l.b16 %v1364
  %v1397 = vunpack.c.l.b16 %v1365
  %v1398 = vunpack.c.l.b16 %v1366
  %v1399 = vunpack.c.l.b16 %v1367
  %v1400 = vunpack.c.l.b16 %v1368
  %v1401 = vunpack.c.l.b16 %v1369
  %v1402 = vunpack.c.l.b16 %v1370
  %v1403 = vunpack.c.l.b16 %v1371
  %v1404 = vpack.c.b16 %v1389, %v1388
  %v1405 = vpack.c.b16 %v1391, %v1390
  %v1406 = vpack.c.b16 %v1393, %v1392
  %v1407 = vpack.c.b16 %v1395, %v1394
  %v1408 = vpack.c.b16 %v1397, %v1396
  %v1409 = vpack.c.b16 %v1399, %v1398
  %v1410 = vpack.c.b16 %v1401, %v1400
  %v1411 = vpack.c.b16 %v1403, %v1402
  %1420 = vmatprep.subr.bf16.mxu0 0
  %1421 = vmatpush1.bf16.msra.mxu0 %v1411
  %1422 = vmatprep.subr.bf16.mxu0 0
  %1423 = vmatpush1.bf16.msra.mxu0 %v1410
  %1424 = vmatprep.subr.bf16.mxu0 0
  %1425 = vmatpush1.bf16.msra.mxu0 %v1409
  %1426 = vmatprep.subr.bf16.mxu0 0
  %1427 = vmatpush1.bf16.msra.mxu0 %v1408
  %1428 = vmatprep.subr.bf16.mxu0 0
  %1429 = vmatpush1.bf16.msra.mxu0 %v1407
  %1430 = vmatprep.subr.bf16.mxu0 0
  %1431 = vmatpush1.bf16.msra.mxu0 %v1406
  %1432 = vmatprep.subr.bf16.mxu0 0
  %1433 = vmatpush1.bf16.msra.mxu0 %v1405
  %1434 = vmatprep.subr.bf16.mxu0 0
  %1435 = vmatpush1.bf16.msra.mxu0 %v1404
  %1436 = vmatprep.subr.bf16.mxu0 0
  %1437 = vmatpush2.bf16.msra.mxu0 0
  %1438 = vmatprep.subr.bf16.mxu0 0
  %1439 = vmatpush2.bf16.msra.mxu0 0
  %1440 = vmatprep.subr.bf16.mxu0 0
  %1441 = vmatpush2.bf16.msra.mxu0 0
  %1442 = vmatprep.subr.bf16.mxu0 0
  %1443 = vmatpush2.bf16.msra.mxu0 0
  %1444 = vmatprep.subr.bf16.mxu0 0
  %1445 = vmatpush2.bf16.msra.mxu0 0
  %1446 = vmatprep.subr.bf16.mxu0 0
  %1447 = vmatpush2.bf16.msra.mxu0 0
  %1448 = vmatprep.subr.bf16.mxu0 0
  %1449 = vmatpush2.bf16.msra.mxu0 0
  %1450 = vmatprep.subr.bf16.mxu0 0
  %1451 = vmatpush2.bf16.msra.mxu0 0
  %1452 = vmatprep.mubr.bf16.mxu0 0
  %1453 = vmatmul.mubr.bf16.gmra.mxu0 %v1354
  %v1454 = vpop.f32.mrf.mxu0
  %v1455 = vadd.f32 0.0, %v1454
  %v1456 = vpop.f32.mrf.mxu0
  %v1457 = vpop.f32.mrf.mxu0
  %v1458 = vadd.f32 0.0, %v1457
  %v1459 = vpop.f32.mrf.mxu0
  %1460 = vmatprep.mubr.bf16.mxu0 0
  %1461 = vmatmul.mubr.bf16.gmra.mxu0 %v1355
  %v1462 = vpop.f32.mrf.mxu0
  %v1463 = vadd.f32 0.0, %v1462
  %v1464 = vpop.f32.mrf.mxu0
  %v1465 = vpop.f32.mrf.mxu0
  %v1466 = vadd.f32 0.0, %v1465
  %v1467 = vpop.f32.mrf.mxu0
  %1468 = vdwg.mxu0
  %v1469 = vadd.f32 %v1328, %v1455
  %v1470 = vadd.f32 %v1331, %v1458
  %v1471 = vadd.f32 %v1336, %v1463
  %v1472 = vadd.f32 %v1339, %v1466
  %v1473 = vld [vmem:[%s5] sm:$0x1]
  %v1474 = vld [vmem:[%s6] sm:$0x1]
  %v1475 = vadd.f32 %v1469, %v1470
  %v1476 = vadd.f32 %v1475, %v1471
  %v1477 = vadd.f32 %v1476, %v1472
  %v1478 = vrot.slane %v1477, 4
  %v1479 = vadd.f32 %v1477, %v1478
  %v1480 = vrot.slane %v1479, 2
  %v1481 = vadd.f32 %v1479, %v1480
  %v1482 = vrot.slane %v1481, 1
  %v1483 = vadd.f32 %v1481, %v1482
  %v1484 = vmul.f32 %v1469, %v1469
  %v1485 = vmul.f32 %v1470, %v1470
  %v1486 = vmul.f32 %v1471, %v1471
  %v1487 = vmul.f32 %v1472, %v1472
  %v1488 = vadd.f32 %v1484, %v1485
  %v1489 = vadd.f32 %v1488, %v1486
  %v1490 = vadd.f32 %v1489, %v1487
  %v1491 = vrot.slane %v1490, 4
  %v1492 = vadd.f32 %v1490, %v1491
  %v1493 = vrot.slane %v1492, 2
  %v1494 = vadd.f32 %v1492, %v1493
  %v1495 = vrot.slane %v1494, 1
  %v1496 = vadd.f32 %v1494, %v1495
  %1497 = vmatprep.subr.mxu0 0.0
  %1498 = vmatpush1.msra.mxu0 %v300
  %1499 = vmatprep.subr.mxu0 0.0
  %1500 = vmatpush1.msra.mxu0 %v299
  %1501 = vmatprep.subr.mxu0 0.0
  %1502 = vmatpush1.msra.mxu0 %v298
  %1503 = vmatprep.subr.mxu0 0.0
  %1504 = vmatpush1.msra.mxu0 %v297
  %1505 = vmatprep.subr.mxu0 0.0
  %1506 = vmatpush1.msra.mxu0 %v296
  %1507 = vmatprep.subr.mxu0 0.0
  %1508 = vmatpush1.msra.mxu0 %v295
  %1509 = vmatprep.subr.mxu0 0.0
  %1510 = vmatpush1.msra.mxu0 %v294
  %1511 = vmatprep.subr.mxu0 0.0
  %1512 = vmatpush1.msra.mxu0 %v293
  %1513 = vmatprep.subr.mxu0 0.0
  %1514 = vmatpush1.msra.mxu0 %v292
  %1515 = vmatprep.subr.mxu0 0.0
  %1516 = vmatpush1.msra.mxu0 %v291
  %1517 = vmatprep.subr.mxu0 0.0
  %1518 = vmatpush1.msra.mxu0 %v290
  %1519 = vmatprep.subr.mxu0 0.0
  %1520 = vmatpush1.msra.mxu0 %v289
  %1521 = vmatprep.subr.mxu0 0.0
  %1522 = vmatpush1.msra.mxu0 %v288
  %1523 = vmatprep.subr.mxu0 0.0
  %1524 = vmatpush1.msra.mxu0 %v287
  %1525 = vmatprep.subr.mxu0 0.0
  %1526 = vmatpush1.msra.mxu0 %v286
  %1527 = vmatprep.subr.mxu0 0.0
  %1528 = vmatpush1.msra.mxu0 %v285
  %1529 = vmatprep.subr.mxu0 0.0
  %1530 = vmatpush2.msra.mxu0 0.0
  %1531 = vmatprep.subr.mxu0 0.0
  %1532 = vmatpush2.msra.mxu0 0.0
  %1533 = vmatprep.subr.mxu0 0.0
  %1534 = vmatpush2.msra.mxu0 0.0
  %1535 = vmatprep.subr.mxu0 0.0
  %1536 = vmatpush2.msra.mxu0 0.0
  %1537 = vmatprep.subr.mxu0 0.0
  %1538 = vmatpush2.msra.mxu0 0.0
  %1539 = vmatprep.subr.mxu0 0.0
  %1540 = vmatpush2.msra.mxu0 0.0
  %1541 = vmatprep.subr.mxu0 0.0
  %1542 = vmatpush2.msra.mxu0 0.0
  %1543 = vmatprep.subr.mxu0 0.0
  %1544 = vmatpush2.msra.mxu0 0.0
  %1545 = vmatprep.subr.mxu0 0.0
  %1546 = vmatpush2.msra.mxu0 0.0
  %1547 = vmatprep.subr.mxu0 0.0
  %1548 = vmatpush2.msra.mxu0 0.0
  %1549 = vmatprep.subr.mxu0 0.0
  %1550 = vmatpush2.msra.mxu0 0.0
  %1551 = vmatprep.subr.mxu0 0.0
  %1552 = vmatpush2.msra.mxu0 0.0
  %1553 = vmatprep.subr.mxu0 0.0
  %1554 = vmatpush2.msra.mxu0 0.0
  %1555 = vmatprep.subr.mxu0 0.0
  %1556 = vmatpush2.msra.mxu0 0.0
  %1557 = vmatprep.subr.mxu0 0.0
  %1558 = vmatpush2.msra.mxu0 0.0
  %1559 = vmatprep.subr.mxu0 0.0
  %1560 = vmatpush2.msra.mxu0 0.0
  %1561 = vmatprep.mubr.f32.mxu0 0.0
  %1562 = vmatmul.mubr.f32.gmra.mxu0 %v1483
  %v1563 = vpop.f32.mrf.mxu0
  %v1564 = vadd.f32 0.0, %v1563
  %v1565 = vpop.f32.mrf.mxu0
  %1566 = vdwg.mxu0
  %v1567 = vmul.f32 %v1564, 0.001953125
  %1568 = vmatprep.subr.mxu0 0.0
  %1569 = vmatpush1.msra.mxu0 %v300
  %1570 = vmatprep.subr.mxu0 0.0
  %1571 = vmatpush1.msra.mxu0 %v299
  %1572 = vmatprep.subr.mxu0 0.0
  %1573 = vmatpush1.msra.mxu0 %v298
  %1574 = vmatprep.subr.mxu0 0.0
  %1575 = vmatpush1.msra.mxu0 %v297
  %1576 = vmatprep.subr.mxu0 0.0
  %1577 = vmatpush1.msra.mxu0 %v296
  %1578 = vmatprep.subr.mxu0 0.0
  %1579 = vmatpush1.msra.mxu0 %v295
  %1580 = vmatprep.subr.mxu0 0.0
  %1581 = vmatpush1.msra.mxu0 %v294
  %1582 = vmatprep.subr.mxu0 0.0
  %1583 = vmatpush1.msra.mxu0 %v293
  %1584 = vmatprep.subr.mxu0 0.0
  %1585 = vmatpush1.msra.mxu0 %v292
  %1586 = vmatprep.subr.mxu0 0.0
  %1587 = vmatpush1.msra.mxu0 %v291
  %1588 = vmatprep.subr.mxu0 0.0
  %1589 = vmatpush1.msra.mxu0 %v290
  %1590 = vmatprep.subr.mxu0 0.0
  %1591 = vmatpush1.msra.mxu0 %v289
  %1592 = vmatprep.subr.mxu0 0.0
  %1593 = vmatpush1.msra.mxu0 %v288
  %1594 = vmatprep.subr.mxu0 0.0
  %1595 = vmatpush1.msra.mxu0 %v287
  %1596 = vmatprep.subr.mxu0 0.0
  %1597 = vmatpush1.msra.mxu0 %v286
  %1598 = vmatprep.subr.mxu0 0.0
  %1599 = vmatpush1.msra.mxu0 %v285
  %1600 = vmatprep.subr.mxu0 0.0
  %1601 = vmatpush2.msra.mxu0 0.0
  %1602 = vmatprep.subr.mxu0 0.0
  %1603 = vmatpush2.msra.mxu0 0.0
  %1604 = vmatprep.subr.mxu0 0.0
  %1605 = vmatpush2.msra.mxu0 0.0
  %1606 = vmatprep.subr.mxu0 0.0
  %1607 = vmatpush2.msra.mxu0 0.0
  %1608 = vmatprep.subr.mxu0 0.0
  %1609 = vmatpush2.msra.mxu0 0.0
  %1610 = vmatprep.subr.mxu0 0.0
  %1611 = vmatpush2.msra.mxu0 0.0
  %1612 = vmatprep.subr.mxu0 0.0
  %1613 = vmatpush2.msra.mxu0 0.0
  %1614 = vmatprep.subr.mxu0 0.0
  %1615 = vmatpush2.msra.mxu0 0.0
  %1616 = vmatprep.subr.mxu0 0.0
  %1617 = vmatpush2.msra.mxu0 0.0
  %1618 = vmatprep.subr.mxu0 0.0
  %1619 = vmatpush2.msra.mxu0 0.0
  %1620 = vmatprep.subr.mxu0 0.0
  %1621 = vmatpush2.msra.mxu0 0.0
  %1622 = vmatprep.subr.mxu0 0.0
  %1623 = vmatpush2.msra.mxu0 0.0
  %1624 = vmatprep.subr.mxu0 0.0
  %1625 = vmatpush2.msra.mxu0 0.0
  %1626 = vmatprep.subr.mxu0 0.0
  %1627 = vmatpush2.msra.mxu0 0.0
  %1628 = vmatprep.subr.mxu0 0.0
  %1629 = vmatpush2.msra.mxu0 0.0
  %1630 = vmatprep.subr.mxu0 0.0
  %1631 = vmatpush2.msra.mxu0 0.0
  %1632 = vmatprep.mubr.f32.mxu0 0.0
  %1633 = vmatmul.mubr.f32.gmra.mxu0 %v1496
  %v1634 = vpop.f32.mrf.mxu0
  %v1635 = vadd.f32 0.0, %v1634
  %v1636 = vpop.f32.mrf.mxu0
  %1637 = vdwg.mxu0
  %v1638 = vmul.f32 %v1635, 0.001953125
  %v1639 = vmul.f32 %v1567, %v1567
  %v1640 = vsub.f32 %v1638, %v1639
  %v1641 = vadd.f32 %v1640, 1e-05
  %v1642 = vrsqrt.pop %v1641
  %v1643 = vmul.f32 %v1642, %v1473
  %v1644 = vmul.f32 %v1567, %v1643
  %v1645 = vsub.f32 %v1474, %v1644
  %v1647 = vsel %vm933, %v1643, 0
  %1649 = vmatprep.subr.mxu0 0.0
  %1650 = vmatpush1.msra.mxu0 0.0
  %1651 = vmatprep.subr.mxu0 0.0
  %1652 = vmatpush1.msra.mxu0 0.0
  %1653 = vmatprep.subr.mxu0 0.0
  %1654 = vmatpush1.msra.mxu0 0.0
  %1655 = vmatprep.subr.mxu0 0.0
  %1656 = vmatpush1.msra.mxu0 0.0
  %1657 = vmatprep.subr.mxu0 0.0
  %1658 = vmatpush1.msra.mxu0 0.0
  %1659 = vmatprep.subr.mxu0 0.0
  %1660 = vmatpush1.msra.mxu0 0.0
  %1661 = vmatprep.subr.mxu0 0.0
  %1662 = vmatpush1.msra.mxu0 0.0
  %1663 = vmatprep.subr.mxu0 0.0
  %1664 = vmatpush1.msra.mxu0 0.0
  %1665 = vmatprep.subr.mxu0 0.0
  %1666 = vmatpush1.msra.mxu0 0.0
  %1667 = vmatprep.subr.mxu0 0.0
  %1668 = vmatpush1.msra.mxu0 0.0
  %1669 = vmatprep.subr.mxu0 0.0
  %1670 = vmatpush1.msra.mxu0 0.0
  %1671 = vmatprep.subr.mxu0 0.0
  %1672 = vmatpush1.msra.mxu0 0.0
  %1673 = vmatprep.subr.mxu0 0.0
  %1674 = vmatpush1.msra.mxu0 0.0
  %1675 = vmatprep.subr.mxu0 0.0
  %1676 = vmatpush1.msra.mxu0 0.0
  %1677 = vmatprep.subr.mxu0 0.0
  %1678 = vmatpush1.msra.mxu0 0.0
  %1679 = vmatprep.subr.mxu0 0.0
  %1680 = vmatpush1.msra.mxu0 %v45
  %1681 = vmatprep.subr.mxu0 0.0
  %1682 = vmatpush2.msra.mxu0 0.0
  %1683 = vmatprep.subr.mxu0 0.0
  %1684 = vmatpush2.msra.mxu0 0.0
  %1685 = vmatprep.subr.mxu0 0.0
  %1686 = vmatpush2.msra.mxu0 0.0
  %1687 = vmatprep.subr.mxu0 0.0
  %1688 = vmatpush2.msra.mxu0 0.0
  %1689 = vmatprep.subr.mxu0 0.0
  %1690 = vmatpush2.msra.mxu0 0.0
  %1691 = vmatprep.subr.mxu0 0.0
  %1692 = vmatpush2.msra.mxu0 0.0
  %1693 = vmatprep.subr.mxu0 0.0
  %1694 = vmatpush2.msra.mxu0 0.0
  %1695 = vmatprep.subr.mxu0 0.0
  %1696 = vmatpush2.msra.mxu0 0.0
  %1697 = vmatprep.subr.mxu0 0.0
  %1698 = vmatpush2.msra.mxu0 0.0
  %1699 = vmatprep.subr.mxu0 0.0
  %1700 = vmatpush2.msra.mxu0 0.0
  %1701 = vmatprep.subr.mxu0 0.0
  %1702 = vmatpush2.msra.mxu0 0.0
  %1703 = vmatprep.subr.mxu0 0.0
  %1704 = vmatpush2.msra.mxu0 0.0
  %1705 = vmatprep.subr.mxu0 0.0
  %1706 = vmatpush2.msra.mxu0 0.0
  %1707 = vmatprep.subr.mxu0 0.0
  %1708 = vmatpush2.msra.mxu0 0.0
  %1709 = vmatprep.subr.mxu0 0.0
  %1710 = vmatpush2.msra.mxu0 0.0
  %1711 = vmatprep.subr.mxu0 0.0
  %1712 = vmatpush2.msra.mxu0 0.0
  %1713 = vmatprep.mubr.f32.mxu0 0.0
  %1714 = vmatmul.mubr.f32.gmra.mxu0 %v1647
  %v1715 = vpop.f32.mrf.mxu0
  %v1716 = vadd.f32 0.0, %v1715
  %v1717 = vpop.f32.mrf.mxu0
  %1718 = vdwg.mxu0
  %v1720 = vsel %vm933, %v1645, 0
  %1722 = vmatprep.subr.mxu0 0.0
  %1723 = vmatpush1.msra.mxu0 0.0
  %1724 = vmatprep.subr.mxu0 0.0
  %1725 = vmatpush1.msra.mxu0 0.0
  %1726 = vmatprep.subr.mxu0 0.0
  %1727 = vmatpush1.msra.mxu0 0.0
  %1728 = vmatprep.subr.mxu0 0.0
  %1729 = vmatpush1.msra.mxu0 0.0
  %1730 = vmatprep.subr.mxu0 0.0
  %1731 = vmatpush1.msra.mxu0 0.0
  %1732 = vmatprep.subr.mxu0 0.0
  %1733 = vmatpush1.msra.mxu0 0.0
  %1734 = vmatprep.subr.mxu0 0.0
  %1735 = vmatpush1.msra.mxu0 0.0
  %1736 = vmatprep.subr.mxu0 0.0
  %1737 = vmatpush1.msra.mxu0 0.0
  %1738 = vmatprep.subr.mxu0 0.0
  %1739 = vmatpush1.msra.mxu0 0.0
  %1740 = vmatprep.subr.mxu0 0.0
  %1741 = vmatpush1.msra.mxu0 0.0
  %1742 = vmatprep.subr.mxu0 0.0
  %1743 = vmatpush1.msra.mxu0 0.0
  %1744 = vmatprep.subr.mxu0 0.0
  %1745 = vmatpush1.msra.mxu0 0.0
  %1746 = vmatprep.subr.mxu0 0.0
  %1747 = vmatpush1.msra.mxu0 0.0
  %1748 = vmatprep.subr.mxu0 0.0
  %1749 = vmatpush1.msra.mxu0 0.0
  %1750 = vmatprep.subr.mxu0 0.0
  %1751 = vmatpush1.msra.mxu0 0.0
  %1752 = vmatprep.subr.mxu0 0.0
  %1753 = vmatpush1.msra.mxu0 %v45
  %1754 = vmatprep.subr.mxu0 0.0
  %1755 = vmatpush2.msra.mxu0 0.0
  %1756 = vmatprep.subr.mxu0 0.0
  %1757 = vmatpush2.msra.mxu0 0.0
  %1758 = vmatprep.subr.mxu0 0.0
  %1759 = vmatpush2.msra.mxu0 0.0
  %1760 = vmatprep.subr.mxu0 0.0
  %1761 = vmatpush2.msra.mxu0 0.0
  %1762 = vmatprep.subr.mxu0 0.0
  %1763 = vmatpush2.msra.mxu0 0.0
  %1764 = vmatprep.subr.mxu0 0.0
  %1765 = vmatpush2.msra.mxu0 0.0
  %1766 = vmatprep.subr.mxu0 0.0
  %1767 = vmatpush2.msra.mxu0 0.0
  %1768 = vmatprep.subr.mxu0 0.0
  %1769 = vmatpush2.msra.mxu0 0.0
  %1770 = vmatprep.subr.mxu0 0.0
  %1771 = vmatpush2.msra.mxu0 0.0
  %1772 = vmatprep.subr.mxu0 0.0
  %1773 = vmatpush2.msra.mxu0 0.0
  %1774 = vmatprep.subr.mxu0 0.0
  %1775 = vmatpush2.msra.mxu0 0.0
  %1776 = vmatprep.subr.mxu0 0.0
  %1777 = vmatpush2.msra.mxu0 0.0
  %1778 = vmatprep.subr.mxu0 0.0
  %1779 = vmatpush2.msra.mxu0 0.0
  %1780 = vmatprep.subr.mxu0 0.0
  %1781 = vmatpush2.msra.mxu0 0.0
  %1782 = vmatprep.subr.mxu0 0.0
  %1783 = vmatpush2.msra.mxu0 0.0
  %1784 = vmatprep.subr.mxu0 0.0
  %1785 = vmatpush2.msra.mxu0 0.0
  %1786 = vmatprep.mubr.f32.mxu0 0.0
  %1787 = vmatmul.mubr.f32.gmra.mxu0 %v1720
  %v1788 = vpop.f32.mrf.mxu0
  %v1789 = vadd.f32 0.0, %v1788
  %v1790 = vpop.f32.mrf.mxu0
  %1791 = vdwg.mxu0
  %v1792 = vlaneseq
  %v1793 = vshrl.u32 %v1792, 7
  %v1794 = vsub.s32 0, %v1793
  %v1795 = vrot.slane %v1716, %v1794
  %v1796 = vmul.f32 %v1469, %v1795
  %v1797 = vmul.f32 %v1470, %v1795
  %v1798 = vmul.f32 %v1471, %v1795
  %v1799 = vmul.f32 %v1472, %v1795
  %v1800 = vlaneseq
  %v1801 = vshrl.u32 %v1800, 7
  %v1802 = vsub.s32 0, %v1801
  %v1803 = vrot.slane %v1789, %v1802
  %v1804 = vadd.f32 %v1796, %v1803
  %v1805 = vadd.f32 %v1797, %v1803
  %v1806 = vadd.f32 %v1798, %v1803
  %v1807 = vadd.f32 %v1799, %v1803
  %v1808 = vmax.f32 %v1804, 0.0
  %v1809 = vmax.f32 %v1805, 0.0
  %v1810 = vmax.f32 %v1806, 0.0
  %v1811 = vmax.f32 %v1807, 0.0
  %1812 = vst [vmem:[%s7] sm:$0xff] %v1808
  %1813 = vst [vmem:[%s7 + $0x8] sm:$0xff] %v1809
  %1814 = vst [vmem:[%s7 + $0x10] sm:$0xff] %v1810
  %1815 = vst [vmem:[%s7 + $0x18] sm:$0xff] %v1811
  // Predicated region
  $region30: #{conv_block_forward.1} parent=0 // pred_check
    _
  $region31: #{conv_block_forward.1} parent=0 // pred_check_branch
    %1817 = sbr.rel (0) target = $region33
  $region32: #{conv_block_forward.1} parent=0 // pred_region
    _
  $region33: #{conv_block_forward.1} parent=0 // pred_fallthru
    _
  // Predicated region
  $region34: #{conv_block_forward.1} parent=0 // pred_check
    _
  $region35: #{conv_block_forward.1} parent=0 // pred_check_branch
    %1819 = sbr.rel (0) target = $region37
  $region36: #{conv_block_forward.1} parent=0 // pred_region
    _
  $region37: #{conv_block_forward.1} parent=0 // pred_fallthru
    _

</llo_original>
